<compile_context>
chip_gen: v7x
topology: tpu7x:2x2x1
jax: 0.10.0
libtpu: 0.0.40
codegen_flags: <defaults>
</compile_context>

<pallas_src>
import functools
import math

import numpy as np
import jax
import jax.numpy as jnp
from jax import lax
from jax.experimental import pallas as pl
from jax.experimental.pallas import tpu as pltpu


# ----------------------------------------------------------------------------
# BlockSpec helpers (1-D grids: per-batch / per-layer blocks + resident weights)
# ----------------------------------------------------------------------------
def _full_spec(shape):
    n = len(shape)
    return pl.BlockSpec(tuple(shape), lambda b, _n=n: (0,) * _n)


def _batch_spec(shape):
    n = len(shape)
    return pl.BlockSpec((1,) + tuple(shape[1:]),
                        lambda b, _n=n: (b,) + (0,) * (_n - 1))


_PARALLEL_1D = pltpu.CompilerParams(dimension_semantics=("parallel",))
# Per-layer kernels: leave room for weights + bias to stay resident as dims grow.
_LAYER_PARAMS = pltpu.CompilerParams(dimension_semantics=("parallel",),
                                     vmem_limit_bytes=48 * 1024 * 1024)


# ----------------------------------------------------------------------------
# Kernel 1: pos_conv (K accumulating deep matmuls) + GELU + AvgPool + add
# ----------------------------------------------------------------------------
def _frontend_kernel(xph_ref, w_ref, b_ref, o_ref, *, K, S, P, L_raw, L_pool, min_len):
    D = w_ref.shape[-1]
    # grouped Conv1d expanded to dense (K, D, D); each tap is a contiguous slice of a
    # stride-phase slab -> no strided/duplicated HBM traffic.
    conv = jnp.zeros((L_raw, D), jnp.float32) + b_ref[...]
    for k in range(K):
        tap = xph_ref[0, k % S, (k // S):(k // S) + L_raw, :].astype(jnp.bfloat16)
        conv = conv + jnp.dot(tap, w_ref[k], preferred_element_type=jnp.float32)
    conv = jax.nn.gelu(conv, approximate=False)                  # (L_raw, D)

    pool = jnp.zeros((L_pool, D), jnp.float32)
    for s in range(S):
        off = P + s
        pool = pool + xph_ref[0, off % S, (off // S):(off // S) + L_pool, :]
    pool = pool * (1.0 / S)

    o_ref[0] = (pool[:min_len] + conv[:min_len]).astype(o_ref.dtype)


def _dense_conv_weight(w, D, G, K):
    """Expand PyTorch grouped Conv1d weight (D, D//G, K) to dense (K, D_in, D_out)."""
    cpg = D // G
    wd = jnp.zeros((K, D, D), jnp.float32)
    for g in range(G):
        blk = w[g * cpg:(g + 1) * cpg]                           # (cpg_out, cpg_in, K)
        wd = wd.at[:, g * cpg:(g + 1) * cpg, g * cpg:(g + 1) * cpg].set(
            jnp.transpose(blk, (2, 1, 0)))                       # (K, cpg_in, cpg_out)
    return wd


def frontend(x, conv_w, conv_b, *, K, S):
    B, T, D = x.shape
    P = K // 2
    L_raw = (T + 2 * P - K) // S + 1
    L_conv = L_raw - (1 if K % 2 == 0 else 0)                    # SamePad trim
    L_pool = T // S
    min_len = min(L_conv, L_pool)

    # S stride-phase slabs (~1x the input) replace the old K-fold im2col duplication.
    L_ph = max((K - 1) // S + L_raw,
               (P + S - 1) // S + L_pool,
               -(-(T + P) // S))
    T_ext = S * L_ph
    x_pad = jnp.pad(x, ((0, 0), (P, T_ext - P - T), (0, 0)))
    xph = jnp.stack([x_pad[:, p::S, :] for p in range(S)], axis=1)   # (B, S, L_ph, D)

    return pl.pallas_call(
        functools.partial(_frontend_kernel, K=K, S=S, P=P,
                          L_raw=L_raw, L_pool=L_pool, min_len=min_len),
        out_shape=jax.ShapeDtypeStruct((B, min_len, D), x.dtype),
        grid=(B,),
        in_specs=[_batch_spec(xph.shape), _full_spec(conv_w.shape),
                  _full_spec(conv_b.shape)],
        out_specs=_batch_spec((B, min_len, D)),
        compiler_params=_PARALLEL_1D,
    )(xph, conv_w, conv_b)


# ----------------------------------------------------------------------------
# Kernel 2: generic Linear (+ optional exact GELU) — used for the upsample layer
# ----------------------------------------------------------------------------
def _linear_kernel(x_ref, w_ref, b_ref, o_ref, *, act):
    y = jnp.dot(x_ref[0].astype(w_ref.dtype), w_ref[...],
                preferred_element_type=jnp.float32) + b_ref[...]
    if act == "gelu":
        y = jax.nn.gelu(y, approximate=False)
    o_ref[0] = y.astype(o_ref.dtype)


def pallas_linear(x, w, b, act=None):
    B, T, _ = x.shape
    Dout = w.shape[1]
    return pl.pallas_call(
        functools.partial(_linear_kernel, act=act),
        out_shape=jax.ShapeDtypeStruct((B, T, Dout), x.dtype),
        grid=(B,),
        in_specs=[_batch_spec(x.shape), _full_spec(w.shape), _full_spec(b.shape)],
        out_specs=_batch_spec((B, T, Dout)),
        compiler_params=_PARALLEL_1D,
    )(x, w, b)


# ----------------------------------------------------------------------------
# Kernel 3: positional key/query projections for ALL layers (runs once at pack time)
#   out_l = Wpos_l^T @ rel_ln^T + b   -> (2A, P2) bf16, already head-major / lane-dense
#   (1/scale is pre-folded into the pos-query half of Wpos / b)
# ----------------------------------------------------------------------------
def _pos_proj_kernel(relT_ref, w_ref, b_ref, o_ref):
    o_ref[0] = (jnp.dot(w_ref[0], relT_ref[...], preferred_element_type=jnp.float32)
                + b_ref[0]).astype(o_ref.dtype)


def pos_projections(rel_lnT, w_posT, b_pos):
    L, O2, _ = w_posT.shape
    P2 = rel_lnT.shape[1]
    return pl.pallas_call(
        _pos_proj_kernel,
        out_shape=jax.ShapeDtypeStruct((L, O2, P2), jnp.bfloat16),
        grid=(L,),
        in_specs=[_full_spec(rel_lnT.shape), _batch_spec(w_posT.shape),
                  _batch_spec(b_pos.shape)],
        out_specs=_batch_spec((L, O2, P2)),
        compiler_params=_PARALLEL_1D,
    )(rel_lnT, w_posT, b_pos)


# ----------------------------------------------------------------------------
# Kernel 4: fused QKV projection + positional score projections (per layer)
#   q/k/v written head-major bf16 (q pre-scaled by 1/scale)
#   c2p_full = (q/scale) @ posk^T  ; p2c_full = k @ (posq/scale)^T  (bf16 out)
# ----------------------------------------------------------------------------
def _qkv_pos_kernel(x_ref, wqkv_ref, bqkv_ref, posk_ref, posq_ref,
                    q_ref, k_ref, v_ref, c2p_ref, p2c_ref, *, H, hd, inv_scale):
    A = H * hd
    x = x_ref[0].astype(jnp.bfloat16)
    qkv = jnp.dot(x, wqkv_ref[...], preferred_element_type=jnp.float32) + bqkv_ref[...]
    for h in range(H):                      # each head's results stored immediately
        qh = (qkv[:, h * hd:(h + 1) * hd] * inv_scale).astype(jnp.bfloat16)
        kh = qkv[:, A + h * hd:A + (h + 1) * hd].astype(jnp.bfloat16)
        vh = qkv[:, 2 * A + h * hd:2 * A + (h + 1) * hd].astype(jnp.bfloat16)
        q_ref[0, h] = qh
        k_ref[0, h] = kh
        v_ref[0, h] = vh
        c2p_ref[0, h] = jnp.dot(qh, posk_ref[h],
                                preferred_element_type=jnp.float32).astype(c2p_ref.dtype)
        p2c_ref[0, h] = jnp.dot(kh, posq_ref[h],
                                preferred_element_type=jnp.float32).astype(p2c_ref.dtype)


# ----------------------------------------------------------------------------
# Kernel 5: disentangled attention core + FFN (post-LayerNorm), head-batched einsums
# ----------------------------------------------------------------------------
def _attn_ffn_kernel(x_ref, q_ref, k_ref, v_ref, bias_ref, wo_ref, bo_ref,
                     ln1g_ref, ln1b_ref, wi_ref, bi_ref, wf_ref, bf_ref,
                     ln2g_ref, ln2b_ref, o_ref, *, eps):
    x = x_ref[0].astype(jnp.float32)                         # (T, D)
    q = q_ref[0]                                             # (H, T, hd) bf16, /scale
    k = k_ref[0]
    v = v_ref[0]

    # padding_mask=None path: all-ones mask is a no-op in XSoftmax.
    s = jnp.einsum('hqd,hkd->hqk', q, k, preferred_element_type=jnp.float32)
    s = s + bias_ref[0].astype(jnp.float32)                  # c2p + p2c (pre-scaled)
    s = s - jnp.max(s, axis=-1, keepdims=True)
    e = jnp.exp(s)
    p = e * pl.reciprocal(jnp.sum(e, axis=-1, keepdims=True), approx=True)
    ctx = jnp.einsum('hqk,hkd->hqd', p.astype(jnp.bfloat16), v,
                     preferred_element_type=jnp.float32)     # (H, T, hd)

    # per-head output projection summed over heads (no concatenate / relayout)
    attn = jnp.einsum('hqd,hdo->hqo', ctx.astype(jnp.bfloat16), wo_ref[...],
                      preferred_element_type=jnp.float32)
    attn = jnp.sum(attn, axis=0) + bo_ref[...] + x           # (T, D)

    def layer_norm(y, g, b):
        mu = jnp.mean(y, axis=-1, keepdims=True)
        var = jnp.mean((y - mu) ** 2, axis=-1, keepdims=True)
        return (y - mu) * lax.rsqrt(var + eps) * g + b

    h1 = layer_norm(attn, ln1g_ref[...], ln1b_ref[...])
    inter = jax.nn.gelu(
        jnp.dot(h1.astype(jnp.bfloat16), wi_ref[...],
                preferred_element_type=jnp.float32) + bi_ref[...],
        approximate=False)
    ffn = jnp.dot(inter.astype(jnp.bfloat16), wf_ref[...],
                  preferred_element_type=jnp.float32) + bf_ref[...]
    o_ref[0] = layer_norm(ffn + h1, ln2g_ref[...], ln2b_ref[...]).astype(o_ref.dtype)


def deberta_layer(x, lw, posk, posq, idx_c2p, idx_p2c, *, H, hd, eps):
    B, T, D = x.shape
    P2 = posk.shape[-1]
    inv_scale = 1.0 / math.sqrt(hd * 3.0)    # scale_factor = 3 for pos_att_type 'p2c|c2p'

    q, k, v, c2p_full, p2c_full = pl.pallas_call(
        functools.partial(_qkv_pos_kernel, H=H, hd=hd, inv_scale=inv_scale),
        out_shape=(jax.ShapeDtypeStruct((B, H, T, hd), jnp.bfloat16),
                   jax.ShapeDtypeStruct((B, H, T, hd), jnp.bfloat16),
                   jax.ShapeDtypeStruct((B, H, T, hd), jnp.bfloat16),
                   jax.ShapeDtypeStruct((B, H, T, P2), jnp.bfloat16),
                   jax.ShapeDtypeStruct((B, H, T, P2), jnp.bfloat16)),
        grid=(B,),
        in_specs=[_batch_spec(x.shape), _full_spec(lw['wqkv'].shape),
                  _full_spec(lw['bqkv'].shape), _full_spec(posk.shape),
                  _full_spec(posq.shape)],
        out_specs=(_batch_spec((B, H, T, hd)), _batch_spec((B, H, T, hd)),
                   _batch_spec((B, H, T, hd)), _batch_spec((B, H, T, P2)),
                   _batch_spec((B, H, T, P2))),
        compiler_params=_LAYER_PARAMS,
    )(x, lw['wqkv'], lw['bqkv'], posk, posq)

    # project-then-gather glue: static broadcastable index tables, all-bf16 traffic
    c2p = jnp.take_along_axis(c2p_full, idx_c2p, axis=-1)                    # (B,H,T,T)
    p2c = jnp.swapaxes(jnp.take_along_axis(p2c_full, idx_p2c, axis=-1), -1, -2)
    bias = c2p + p2c                                                         # bf16

    args = [x, q, k, v, bias, lw['wo_h'], lw['bo'], lw['ln1_g'], lw['ln1_b'],
            lw['wi'], lw['bi'], lw['wf'], lw['bf'], lw['ln2_g'], lw['ln2_b']]
    in_specs = ([_batch_spec(a.shape) for a in args[:5]] +
                [_full_spec(a.shape) for a in args[5:]])
    return pl.pallas_call(
        functools.partial(_attn_ffn_kernel, eps=eps),
        out_shape=jax.ShapeDtypeStruct((B, T, D), x.dtype),
        grid=(B,),
        in_specs=in_specs,
        out_specs=_batch_spec((B, T, D)),
        compiler_params=_LAYER_PARAMS,
    )(*args)


# ----------------------------------------------------------------------------
# DeBERTa relative-position machinery (static host-side index tables)
# ----------------------------------------------------------------------------
def make_log_bucket_position(relative_pos, bucket_size, max_position):
    sign = np.sign(relative_pos)
    mid = bucket_size // 2
    abs_pos = np.where((relative_pos < mid) & (relative_pos > -mid),
                       mid - 1, np.abs(relative_pos))
    log_pos = np.ceil(np.log(abs_pos / mid) /
                      np.log((max_position - 1) / mid) * (mid - 1)) + mid
    return np.where(abs_pos <= mid, relative_pos, log_pos * sign).astype(int)


def build_relative_position(q, k, bucket_size, max_position):
    rel = np.arange(q)[:, None] - np.arange(k)[None, :]
    if bucket_size > 0 and max_position > 0:
        rel = make_log_bucket_position(rel, bucket_size, max_position)
    return rel


def _layer_norm_jnp(x, g, b, eps):
    mu = x.mean(-1, keepdims=True)
    var = ((x - mu) ** 2).mean(-1, keepdims=True)
    return (x - mu) / jnp.sqrt(var + eps) * g + b


# ----------------------------------------------------------------------------
# One-time weight packing (outside the jitted forward)
# ----------------------------------------------------------------------------
def pack_params(params, cfg):
    D, H, hd, F, S = cfg['D'], cfg['H'], cfg['hd'], cfg['F'], cfg['S']
    A = H * hd
    K, G, L = cfg['conv_pos'], cfg['conv_pos_groups'], cfg['layers']
    eps = cfg['layer_norm_eps']
    span = cfg['position_buckets']
    P2 = 2 * span
    inv_scale = 1.0 / math.sqrt(hd * 3.0)

    packed = {
        # weight_norm at init reproduces the sampled weight -> used directly
        'conv_w': _dense_conv_weight(params['conv_w'], D, G, K).astype(jnp.bfloat16),
        'conv_b': params['conv_b'].reshape(1, D),
        'up_w': params['up_w'].astype(jnp.bfloat16),
        'up_b': params['up_b'].reshape(1, D * S),
    }

    # relative embeddings: encoder-level LayerNorm (parameter-only) + transpose
    rel_ln = _layer_norm_jnp(params['rel_emb'], params['rel_ln_g'],
                             params['rel_ln_b'], eps)
    rel_lnT = rel_ln.T.astype(jnp.bfloat16)                        # (D, P2)

    # positional key/query projections for all layers in ONE pallas call
    # (share_att_key=True: reuse each layer's Wk / Wq; 1/scale folded into the Wq half)
    w_posT = jnp.stack(
        [jnp.concatenate([lp['wk'].T, (lp['wq'] * inv_scale).T], axis=0)
         for lp in params['layers']], axis=0).astype(jnp.bfloat16)  # (L, 2A, D)
    b_pos = jnp.stack(
        [jnp.concatenate([lp['bk'], lp['bq'] * inv_scale])
         for lp in params['layers']], axis=0).reshape(L, 2 * A, 1)  # (L, 2A, 1)
    pos_all = pos_projections(rel_lnT, w_posT, b_pos)               # (L, 2A, P2) bf16
    pos_all = pos_all.reshape(L, 2, H, hd, P2)
    packed['posk'] = pos_all[:, 0]                                  # (L, H, hd, P2)
    packed['posq'] = pos_all[:, 1]                                  # pre-scaled

    layers = []
    for lp in params['layers']:
        layers.append(dict(
            wqkv=jnp.concatenate([lp['wq'], lp['wk'], lp['wv']],
                                 axis=1).astype(jnp.bfloat16),
            bqkv=jnp.concatenate([lp['bq'], lp['bk'], lp['bv']]).reshape(1, 3 * A),
            wo_h=lp['wo'].reshape(H, hd, D).astype(jnp.bfloat16),
            bo=lp['bo'].reshape(1, D),
            ln1_g=lp['ln1_g'].reshape(1, D), ln1_b=lp['ln1_b'].reshape(1, D),
            wi=lp['wi'].astype(jnp.bfloat16), bi=lp['bi'].reshape(1, F),
            wf=lp['wf'].astype(jnp.bfloat16), bf=lp['bf'].reshape(1, D),
            ln2_g=lp['ln2_g'].reshape(1, D), ln2_b=lp['ln2_b'].reshape(1, D)))
    packed['layers'] = layers
    return packed


# ----------------------------------------------------------------------------
# Full forward (jitted; consumes pre-packed weights)
# ----------------------------------------------------------------------------
def squeeze_deberta_forward(x, packed, cfg, layer=None):
    B, T, D = x.shape
    H, hd, S = cfg['H'], cfg['hd'], cfg['S']
    eps = cfg['layer_norm_eps']
    span = cfg['position_buckets']
    P2 = 2 * span

    # 1. pos_conv + avg-pool + add (squeeze by factor S)
    feats = frontend(x, packed['conv_w'], packed['conv_b'], K=cfg['conv_pos'], S=S)
    Tq = feats.shape[1]

    # 2. static relative-position index tables (trace-time numpy; broadcastable)
    relpos = build_relative_position(Tq, Tq, span, cfg['max_relative_positions'])
    idx_c2p = jnp.asarray(np.clip(relpos + span, 0, P2 - 1).astype(np.int32))[None, None]
    idx_p2c = jnp.asarray(np.clip(-relpos + span, 0, P2 - 1).astype(np.int32))[None, None]

    # 3. transformer layers
    hidden = feats
    layer_results = []
    for li, lw in enumerate(packed['layers']):
        hidden = deberta_layer(hidden, lw, packed['posk'][li], packed['posq'][li],
                               idx_c2p, idx_p2c, H=H, hd=hd, eps=eps)
        layer_results.append(hidden)

    x_sel = layer_results[-1] if layer is None else layer_results[layer]

    # 4. upsample: Linear(D, D*S) + GELU + rearrange 'b t (s c) -> b (t s) c'
    up = pallas_linear(x_sel, packed['up_w'], packed['up_b'], act="gelu")
    up = up.reshape(B, Tq, S, D).reshape(B, Tq * S, D)
    if up.shape[1] < T:
        up = jnp.pad(up, ((0, 0), (0, T - up.shape[1]), (0, 0)))
    return up, layer_results


# ----------------------------------------------------------------------------
# Deterministic parameter initialization (synthetic; no checkpoint load)
# ----------------------------------------------------------------------------
def init_params(key, cfg):
    D, H, hd, F, S = cfg['D'], cfg['H'], cfg['hd'], cfg['F'], cfg['S']
    A = H * hd
    K, G = cfg['conv_pos'], cfg['conv_pos_groups']
    pos_size = 2 * cfg['position_buckets']
    keys = iter(jax.random.split(key, 8 + 16 * cfg['layers']))

    def nrm(shape, std):
        return std * jax.random.normal(next(keys), shape, jnp.float32)

    params = {
        'conv_w': nrm((D, D // G, K), math.sqrt(4.0 / (K * D))),  # Conv1d layout
        'conv_b': jnp.zeros((D,), jnp.float32),
        'rel_emb': nrm((pos_size, D), 0.02),
        'rel_ln_g': jnp.ones((D,), jnp.float32),
        'rel_ln_b': jnp.zeros((D,), jnp.float32),
        'up_w': nrm((D, D * S), math.sqrt(2.0 / (D * S))),
        'up_b': jnp.zeros((D * S,), jnp.float32),
    }
    layers = []
    for _ in range(cfg['layers']):
        layers.append(dict(
            wq=nrm((D, A), 0.02), bq=nrm((A,), 0.02),
            wk=nrm((D, A), 0.02), bk=nrm((A,), 0.02),
            wv=nrm((D, A), 0.02), bv=nrm((A,), 0.02),
            wo=nrm((A, D), 0.02), bo=nrm((D,), 0.02),
            ln1_g=jnp.ones((D,), jnp.float32), ln1_b=jnp.zeros((D,), jnp.float32),
            wi=nrm((D, F), 0.02), bi=nrm((F,), 0.02),
            wf=nrm((F, D), 0.02), bf=nrm((D,), 0.02),
            ln2_g=jnp.ones((D,), jnp.float32), ln2_b=jnp.zeros((D,), jnp.float32),
        ))
    params['layers'] = layers
    return params


# ----------------------------------------------------------------------------
if __name__ == "__main__":
    cfg = dict(
        D=128, H=2, hd=64, F=256, layers=2,          # encoder dims (head size fixed at 64)
        conv_pos=8, conv_pos_groups=4, S=2,          # pos conv / squeeze factor
        position_buckets=256, max_relative_positions=512,
        layer_norm_eps=1e-7,
    )
    B, T = 2, 17                                     # T=17 exercises the final F.pad

    key = jax.random.PRNGKey(0)
    pkey, xkey = jax.random.split(key)
    params = init_params(pkey, cfg)
    packed = pack_params(params, cfg)                # one-time weight packing (+ pos proj)
    x = jax.random.normal(xkey, (B, T, cfg['D']), jnp.float32)

    fwd = jax.jit(functools.partial(squeeze_deberta_forward, cfg=cfg))
    out, layer_results = fwd(x, packed)
    jax.block_until_ready(out)
    for lr in layer_results:
        lr.block_until_ready()

    assert out.shape == (B, T, cfg['D'])
    assert len(layer_results) == cfg['layers']
    assert bool(jnp.all(jnp.isfinite(out)))
    print("KERNEL_OK")
</pallas_src>

<mosaic_0001>
module attributes {stable_mosaic.version = 11 : i64} {
  func.func @_pos_proj_kernel(%arg0: i32, %arg1: memref<128x512xbf16, #tpu.memory_space<vmem>>, %arg2: memref<1x256x128xbf16, #tpu.memory_space<vmem>>, %arg3: memref<1x256x1xf32, #tpu.memory_space<vmem>>, %arg4: memref<1x256x512xbf16, #tpu.memory_space<vmem>>) attributes {dimension_semantics = [#tpu.dimension_semantics<parallel>], iteration_bounds = array<i64: 2>, scalar_prefetch = 0 : i64, scratch_operands = 0 : i64, tpu.core_type = #tpu.core_type<tc>, window_params = [{pipeline_mode = #tpu.pipeline_mode<synchronous>, transform_indices = @transform_0, window_bounds = array<i64: 128, 512>}, {transform_indices = @transform_1, window_bounds = array<i64: 1, 256, 128>}, {transform_indices = @transform_2, window_bounds = array<i64: 1, 256, 1>}, {transform_indices = @transform_3, window_bounds = array<i64: 1, 256, 512>}]} {
    %c0 = arith.constant 0 : index
    %c0_0 = arith.constant 0 : index
    %c0_1 = arith.constant 0 : index
    %0 = vector.load %arg2[%c0, %c0_0, %c0_1] : memref<1x256x128xbf16, #tpu.memory_space<vmem>>, vector<1x256x128xbf16>
    %1 = vector.shape_cast %0 : vector<1x256x128xbf16> to vector<256x128xbf16>
    %c0_2 = arith.constant 0 : index
    %c0_3 = arith.constant 0 : index
    %2 = vector.load %arg1[%c0_2, %c0_3] : memref<128x512xbf16, #tpu.memory_space<vmem>>, vector<128x512xbf16>
    %cst = arith.constant dense<0.000000e+00> : vector<256x512xf32>
    %3 = tpu.matmul %1, %2, %cst {dimension_numbers = #tpu.dot_dimension_numbers<[1], [0], [0], [1], [0, 0, 1, 1], [], []>} : vector<256x128xbf16>, vector<128x512xbf16>, vector<256x512xf32> -> vector<256x512xf32>
    %c0_4 = arith.constant 0 : index
    %c0_5 = arith.constant 0 : index
    %c0_6 = arith.constant 0 : index
    %4 = vector.load %arg3[%c0_4, %c0_5, %c0_6] : memref<1x256x1xf32, #tpu.memory_space<vmem>>, vector<1x256x1xf32>
    %5 = vector.shape_cast %4 : vector<1x256x1xf32> to vector<256x1xf32>
    %6 = vector.broadcast %5 : vector<256x1xf32> to vector<256x512xf32>
    %7 = arith.addf %3, %6 : vector<256x512xf32>
    %8 = arith.truncf %7 : vector<256x512xf32> to vector<256x512xbf16>
    %c0_7 = arith.constant 0 : index
    %c0_8 = arith.constant 0 : index
    %c0_9 = arith.constant 0 : index
    %9 = vector.load %arg4[%c0_7, %c0_8, %c0_9] : memref<1x256x512xbf16, #tpu.memory_space<vmem>>, vector<1x256x512xbf16>
    %10 = vector.shape_cast %9 : vector<1x256x512xbf16> to vector<256x512xbf16>
    %11 = vector.shape_cast %8 : vector<256x512xbf16> to vector<1x256x512xbf16>
    tpu.vector_store %arg4[%c0_7, %c0_8, %c0_9], %11 {strides = array<i32>} : memref<1x256x512xbf16, #tpu.memory_space<vmem>>, vector<1x256x512xbf16>,
    return
  }
  func.func @transform_0(%arg0: i32) -> (i32, i32) {
    %c0_i32 = arith.constant 0 : i32
    %c0_i32_0 = arith.constant 0 : i32
    %c0_i32_1 = arith.constant 0 : i32
    return %c0_i32, %c0_i32_0 : i32, i32
  }
  func.func @transform_1(%arg0: i32) -> (i32, i32, i32) {
    %c0_i32 = arith.constant 0 : i32
    %c0_i32_0 = arith.constant 0 : i32
    %c0_i32_1 = arith.constant 0 : i32
    return %arg0, %c0_i32, %c0_i32_0 : i32, i32, i32
  }
  func.func @transform_2(%arg0: i32) -> (i32, i32, i32) {
    %c0_i32 = arith.constant 0 : i32
    %c0_i32_0 = arith.constant 0 : i32
    %c0_i32_1 = arith.constant 0 : i32
    return %arg0, %c0_i32, %c0_i32_0 : i32, i32, i32
  }
  func.func @transform_3(%arg0: i32) -> (i32, i32, i32) {
    %c0_i32 = arith.constant 0 : i32
    %c0_i32_0 = arith.constant 0 : i32
    %c0_i32_1 = arith.constant 0 : i32
    return %arg0, %c0_i32, %c0_i32_0 : i32, i32, i32
  }
}

</mosaic_0001>

<llo_original>
// kernel: tpu_custom_call.1
$region0: #{tpu_custom_call.1}
  #allocation0 [shape = 'u32[]', space=smem, size = 0x4, offset = 0x4, fixed_abs, tag = 'smem constant byte address 0x4 - core index']
  #allocation1 [shape = 'u32[144,128]{1,0:T(1,128)}', space=vmem, size = 0x12000, scoped, tag = 'internal scratch']
  %s0 = inlined_call_operand.vmem [shape: bf16[128,512], index: 0, kind: input, shape index: {}]
  %s1 = inlined_call_operand.vmem [shape: bf16[2,256,128], index: 1, kind: input, shape index: {}]
  %s2 = inlined_call_operand.vmem [shape: f32[2,256,1], index: 2, kind: input, shape index: {}]
  %s3 = inlined_call_operand.hbm [shape: bf16[2,256,512], index: 3, kind: output, shape index: {}]
  %s4 = sld [smem:[#allocation0]]
  $region45: #{tpu_custom_call.1} parent=0
    _
  %s6 = ssub.s32 1, %s4
  %s7 = scalar_select 0, %s6, %s4
  $region1: #{tpu_custom_call.1} parent=0
    #allocation2 [shape = 'u8[524288]{0}', space=vmem, size = 0x80000, scoped, tag = 'output window, operand 0']
    #allocation3 [shape = 's32[2]{0}', space=sflag, size = 0x8, scoped, tag = 'scoped memory for tpu_custom_call.1']
    %8 = vsyncpa [#allocation3], 0
    %s9 = scalar_lea.sflag [#allocation3], 1
    %10 = vsyncpa %s9, 0
    loop: start=0, step=1, limit=4
    $region2: #{tpu_custom_call.1} parent=1 // loop_pre_header
      _
    $region3: #{tpu_custom_call.1} parent=1 // loop_header
      %s12 = sphi 0, %s16
      %p13 = scmp.ge.s32.totalorder %s12, 4
      %s20 = sphi 0, %s20
      %s22 = sphi 0, %s20
      %s23 = sphi 0, %s22
      %s37 = sphi 0, %s23
      %s43 = sphi 0, %s45
      %s46 = sphi 0, %s43
      %s47 = sphi 0, %s46
      %s63 = sphi 0, %s47
      %s69 = sphi 0, %s71
      %s72 = sphi 0, %s69
      %s73 = sphi 0, %s72
      %s89 = sphi 0, %s73
      %s95 = sphi 0, %s97
      %s98 = sphi 0, %s95
      %s99 = sphi 0, %s98
      %s115 = sphi 0, %s99
    $region4: #{tpu_custom_call.1} parent=1 // loop_header_branch
      %15 = sbr.rel (%p13) target = $region8
    $region5: #{tpu_custom_call.1} parent=1 // loop_body
      %s17 = ssub.s32 %s12, 1
      %s18 = ssub.s32 %s12, 2
      %s19 = sadd.s32 %s12, 1
      %s21 = sadd.s32 %s20, 1
      %p24 = scmp.eq.s32.totalorder %s12, 1
      %p25 = scmp.ne.s32.totalorder %s20, %s22
      %p26 = scmp.eq.s32.totalorder %s12, 0
      %p27 = por %p25, %p26
      %p28 = scmp.ne.s32.totalorder %s20, %s22
      %p29 = scmp.eq.s32.totalorder %s17, 1
      %p30 = por %p28, %p29
      %p31 = scmp.ne.s32.totalorder %s22, %s23
      %p32 = scmp.eq.s32.totalorder %s17, 0
      %p33 = por %p31, %p32
      %p34 = scmp.ne.s32.totalorder %s22, %s23
      %p35 = scmp.eq.s32.totalorder %s18, 1
      %p36 = por %p34, %p35
      %p38 = scmp.ne.s32.totalorder %s23, %s37
      %p39 = scmp.eq.s32.totalorder %s18, 0
      %p40 = por %p38, %p39
      %s41 = ssub.s32 %s12, %s19
      %p42 = scmp.eq.s32.totalorder %s41, 0
      %s44 = sadd.s32 %s43, 1
      %s45 = scalar_select %p42, %s43, %s44
      %p48 = pneg %p42
      %p49 = scmp.eq.s32.totalorder %s12, 1
      %p50 = por %p48, %p49
      %p51 = scmp.ne.s32.totalorder %s43, %s46
      %p52 = scmp.eq.s32.totalorder %s12, 0
      %p53 = por %p51, %p52
      %p54 = scmp.ne.s32.totalorder %s43, %s46
      %p55 = scmp.eq.s32.totalorder %s17, 1
      %p56 = por %p54, %p55
      %p57 = scmp.ne.s32.totalorder %s46, %s47
      %p58 = scmp.eq.s32.totalorder %s17, 0
      %p59 = por %p57, %p58
      %p60 = scmp.ne.s32.totalorder %s46, %s47
      %p61 = scmp.eq.s32.totalorder %s18, 1
      %p62 = por %p60, %p61
      %p64 = scmp.ne.s32.totalorder %s47, %s63
      %p65 = scmp.eq.s32.totalorder %s18, 0
      %p66 = por %p64, %p65
      %s67 = ssub.s32 %s12, %s19
      %p68 = scmp.eq.s32.totalorder %s67, 0
      %s70 = sadd.s32 %s69, 1
      %s71 = scalar_select %p68, %s69, %s70
      %p74 = pneg %p68
      %p75 = scmp.eq.s32.totalorder %s12, 1
      %p76 = por %p74, %p75
      %p77 = scmp.ne.s32.totalorder %s69, %s72
      %p78 = scmp.eq.s32.totalorder %s12, 0
      %p79 = por %p77, %p78
      %p80 = scmp.ne.s32.totalorder %s69, %s72
      %p81 = scmp.eq.s32.totalorder %s17, 1
      %p82 = por %p80, %p81
      %p83 = scmp.ne.s32.totalorder %s72, %s73
      %p84 = scmp.eq.s32.totalorder %s17, 0
      %p85 = por %p83, %p84
      %p86 = scmp.ne.s32.totalorder %s72, %s73
      %p87 = scmp.eq.s32.totalorder %s18, 1
      %p88 = por %p86, %p87
      %p90 = scmp.ne.s32.totalorder %s73, %s89
      %p91 = scmp.eq.s32.totalorder %s18, 0
      %p92 = por %p90, %p91
      %s93 = ssub.s32 %s12, %s19
      %p94 = scmp.eq.s32.totalorder %s93, 0
      %s96 = sadd.s32 %s95, 1
      %s97 = scalar_select %p94, %s95, %s96
      %p100 = pneg %p94
      %p101 = scmp.eq.s32.totalorder %s12, 1
      %p102 = por %p100, %p101
      %p103 = scmp.ne.s32.totalorder %s95, %s98
      %p104 = scmp.eq.s32.totalorder %s12, 0
      %p105 = por %p103, %p104
      %p106 = scmp.ne.s32.totalorder %s95, %s98
      %p107 = scmp.eq.s32.totalorder %s17, 1
      %p108 = por %p106, %p107
      %p109 = scmp.ne.s32.totalorder %s98, %s99
      %p110 = scmp.eq.s32.totalorder %s17, 0
      %p111 = por %p109, %p110
      %p112 = scmp.ne.s32.totalorder %s98, %s99
      %p113 = scmp.eq.s32.totalorder %s18, 1
      %p114 = por %p112, %p113
      %p116 = scmp.ne.s32.totalorder %s99, %s115
      %p117 = scmp.eq.s32.totalorder %s18, 0
      %p118 = por %p116, %p117
      %p119 = scmp.le.s32.totalorder 1, %s12
      %p120 = scmp.lt.s32.totalorder %s12, 3
      %p121 = pnand %p119, %p120
      %p122 = pneg %p121
      // Predicated region
      $region9: #{tpu_custom_call.1} parent=5 // pred_check
        _
      $region10: #{tpu_custom_call.1} parent=5 // pred_check_branch
        %124 = sbr.rel (%p121) target = $region12
      $region11: #{tpu_custom_call.1} parent=5 // pred_region
        %s125 = ssub.s32 %s12, 1
        // Predicated region
        $region13: #{tpu_custom_call.1} parent=11 // pred_check
          %p126 = pneg %p33
        $region14: #{tpu_custom_call.1} parent=11 // pred_check_branch
          %128 = sbr.rel (%p126) target = $region16
        $region15: #{tpu_custom_call.1} parent=11 // pred_region
          _
        $region16: #{tpu_custom_call.1} parent=11 // pred_fallthru
          _
      $region12: #{tpu_custom_call.1} parent=5 // pred_fallthru
        _
      %p129 = scmp.lt.s32.totalorder %s12, 2
      // Predicated region
      $region17: #{tpu_custom_call.1} parent=5 // pred_check
        %p130 = pneg %p129
      $region18: #{tpu_custom_call.1} parent=5 // pred_check_branch
        %132 = sbr.rel (%p130) target = $region20
      $region19: #{tpu_custom_call.1} parent=5 // pred_region
        // Predicated region
        $region21: #{tpu_custom_call.1} parent=19 // pred_check
          %p133 = pneg %p53
        $region22: #{tpu_custom_call.1} parent=19 // pred_check_branch
          %135 = sbr.rel (%p133) target = $region24
        $region23: #{tpu_custom_call.1} parent=19 // pred_region
          %p136 = scmp.lt.s32.totalorder %s12, 1
          %s137 = scalar_select %p136, %s12, 1
          %s138 = smul.addr %s137, 32
          %s139 = smul.addr %s138, 4
          %s140 = scalar_lea.vmem %s1, %s139
        $region24: #{tpu_custom_call.1} parent=19 // pred_fallthru
          _
        // Predicated region
        $region25: #{tpu_custom_call.1} parent=19 // pred_check
          %p141 = pneg %p79
        $region26: #{tpu_custom_call.1} parent=19 // pred_check_branch
          %143 = sbr.rel (%p141) target = $region28
        $region27: #{tpu_custom_call.1} parent=19 // pred_region
          %p144 = scmp.lt.s32.totalorder %s12, 1
          %s145 = scalar_select %p144, %s12, 1
          %s146 = smul.addr %s145, 32
          %s147 = smul.addr %s146, 8
          %s148 = scalar_lea.vmem %s2, %s147
        $region28: #{tpu_custom_call.1} parent=19 // pred_fallthru
          _
      $region20: #{tpu_custom_call.1} parent=5 // pred_fallthru
        _
      %p149 = scmp.le.s32.totalorder 1, %s12
      %p150 = scmp.lt.s32.totalorder %s12, 3
      %p151 = pnand %p149, %p150
      %p152 = pneg %p151
      // Predicated region
      $region29: #{tpu_custom_call.1} parent=5 // pred_check
        _
      $region30: #{tpu_custom_call.1} parent=5 // pred_check_branch
        %154 = sbr.rel (%p151) target = $region32
      $region31: #{tpu_custom_call.1} parent=5 // pred_region
        %s155 = ssub.s32 %s12, 1
        %p156 = pneg %p33
        %p157 = pneg %p30
        %p158 = scmp.lt.s32.totalorder %s17, 1
        %s159 = scalar_select %p158, %s17, 1
        %s160 = smul.addr %s159, 32
        %s161 = smul.addr %s160, 4
        %s162 = scalar_lea.vmem %s1, %s161
        %p163 = pneg %p59
        %p164 = pneg %p56
        %p165 = scmp.lt.s32.totalorder %s17, 1
        %s166 = scalar_select %p165, %s17, 1
        %s167 = smul.addr %s166, 32
        %s168 = smul.addr %s167, 8
        %s169 = scalar_lea.vmem %s2, %s168
        %p170 = pneg %p85
        %p171 = pneg %p82
        %p172 = pneg %p111
        %p173 = pneg %p108
        %s174 = sand.u32 %s98, 1
        %s175 = scalar_lea.sflag [#allocation3], %s174
        %s176 = sand.u32 %s98, 1
        %s177 = smul.addr %s176, 512
        %s178 = scalar_lea.vmem [#allocation2], %s177
        %p179 = scmp.lt.s32.totalorder %s17, 1
        %s180 = scalar_select %p179, %s17, 1
        %s181 = smul.addr %s180, 32
        %s182 = smul.addr %s181, 4
        %s183 = scalar_lea.vmem %s1, %s182
        %p184 = scmp.lt.s32.totalorder %s17, 1
        %s185 = scalar_select %p184, %s17, 1
        %s186 = smul.addr %s185, 32
        %s187 = smul.addr %s186, 8
        %s188 = scalar_lea.vmem %s2, %s187
        %v190 = vld [vmem:[%s183] sm:$0xf]
        %v191 = vld [vmem:[%s183 + $0x4] sm:$0xf]
        %v192 = vld [vmem:[%s183 + $0x8] sm:$0xf]
        %v193 = vld [vmem:[%s183 + $0xc] sm:$0xf]
        %v194 = vld [vmem:[%s183 + $0x10] sm:$0xf]
        %v195 = vld [vmem:[%s183 + $0x14] sm:$0xf]
        %v196 = vld [vmem:[%s183 + $0x18] sm:$0xf]
        %v197 = vld [vmem:[%s183 + $0x1c] sm:$0xf]
        %v198 = vld [vmem:[%s183 + $0x20] sm:$0xf]
        %v199 = vld [vmem:[%s183 + $0x24] sm:$0xf]
        %v200 = vld [vmem:[%s183 + $0x28] sm:$0xf]
        %v201 = vld [vmem:[%s183 + $0x2c] sm:$0xf]
        %v202 = vld [vmem:[%s183 + $0x30] sm:$0xf]
        %v203 = vld [vmem:[%s183 + $0x34] sm:$0xf]
        %v204 = vld [vmem:[%s183 + $0x38] sm:$0xf]
        %v205 = vld [vmem:[%s183 + $0x3c] sm:$0xf]
        %v206 = vld [vmem:[%s183 + $0x40] sm:$0xf]
        %v207 = vld [vmem:[%s183 + $0x44] sm:$0xf]
        %v208 = vld [vmem:[%s183 + $0x48] sm:$0xf]
        %v209 = vld [vmem:[%s183 + $0x4c] sm:$0xf]
        %v210 = vld [vmem:[%s183 + $0x50] sm:$0xf]
        %v211 = vld [vmem:[%s183 + $0x54] sm:$0xf]
        %v212 = vld [vmem:[%s183 + $0x58] sm:$0xf]
        %v213 = vld [vmem:[%s183 + $0x5c] sm:$0xf]
        %v214 = vld [vmem:[%s183 + $0x60] sm:$0xf]
        %v215 = vld [vmem:[%s183 + $0x64] sm:$0xf]
        %v216 = vld [vmem:[%s183 + $0x68] sm:$0xf]
        %v217 = vld [vmem:[%s183 + $0x6c] sm:$0xf]
        %v218 = vld [vmem:[%s183 + $0x70] sm:$0xf]
        %v219 = vld [vmem:[%s183 + $0x74] sm:$0xf]
        %v220 = vld [vmem:[%s183 + $0x78] sm:$0xf]
        %v221 = vld [vmem:[%s183 + $0x7c] sm:$0xf]
        %v222 = vld [vmem:[%s0] sm:$0xff]
        %v223 = vld [vmem:[%s0 + $0x8] sm:$0xff]
        %v224 = vld [vmem:[%s0 + $0x10] sm:$0xff]
        %v225 = vld [vmem:[%s0 + $0x18] sm:$0xff]
        %v226 = vld [vmem:[%s0 + $0x20] sm:$0xff]
        %v227 = vld [vmem:[%s0 + $0x28] sm:$0xff]
        %v228 = vld [vmem:[%s0 + $0x30] sm:$0xff]
        %v229 = vld [vmem:[%s0 + $0x38] sm:$0xff]
        %v230 = vld [vmem:[%s0 + $0x40] sm:$0xff]
        %v231 = vld [vmem:[%s0 + $0x48] sm:$0xff]
        %v232 = vld [vmem:[%s0 + $0x50] sm:$0xff]
        %v233 = vld [vmem:[%s0 + $0x58] sm:$0xff]
        %v234 = vld [vmem:[%s0 + $0x60] sm:$0xff]
        %v235 = vld [vmem:[%s0 + $0x68] sm:$0xff]
        %v236 = vld [vmem:[%s0 + $0x70] sm:$0xff]
        %v237 = vld [vmem:[%s0 + $0x78] sm:$0xff]
        %v238 = vld [vmem:[%s0 + $0x80] sm:$0xff]
        %v239 = vld [vmem:[%s0 + $0x88] sm:$0xff]
        %v240 = vld [vmem:[%s0 + $0x90] sm:$0xff]
        %v241 = vld [vmem:[%s0 + $0x98] sm:$0xff]
        %v242 = vld [vmem:[%s0 + $0xa0] sm:$0xff]
        %v243 = vld [vmem:[%s0 + $0xa8] sm:$0xff]
        %v244 = vld [vmem:[%s0 + $0xb0] sm:$0xff]
        %v245 = vld [vmem:[%s0 + $0xb8] sm:$0xff]
        %v246 = vld [vmem:[%s0 + $0xc0] sm:$0xff]
        %v247 = vld [vmem:[%s0 + $0xc8] sm:$0xff]
        %v248 = vld [vmem:[%s0 + $0xd0] sm:$0xff]
        %v249 = vld [vmem:[%s0 + $0xd8] sm:$0xff]
        %v250 = vld [vmem:[%s0 + $0xe0] sm:$0xff]
        %v251 = vld [vmem:[%s0 + $0xe8] sm:$0xff]
        %v252 = vld [vmem:[%s0 + $0xf0] sm:$0xff]
        %v253 = vld [vmem:[%s0 + $0xf8] sm:$0xff]
        %v254 = vld [vmem:[%s188] sm:$0xff]
        %v255 = vld [vmem:[%s188 + $0x8] sm:$0xff]
        %v256 = vld [vmem:[%s188 + $0x10] sm:$0xff]
        %v257 = vld [vmem:[%s188 + $0x18] sm:$0xff]
        %v258 = vld [vmem:[%s188 + $0x20] sm:$0xff]
        %v259 = vld [vmem:[%s188 + $0x28] sm:$0xff]
        %v260 = vld [vmem:[%s188 + $0x30] sm:$0xff]
        %v261 = vld [vmem:[%s188 + $0x38] sm:$0xff]
        %v262 = vld [vmem:[%s188 + $0x40] sm:$0xff]
        %v263 = vld [vmem:[%s188 + $0x48] sm:$0xff]
        %v264 = vld [vmem:[%s188 + $0x50] sm:$0xff]
        %v265 = vld [vmem:[%s188 + $0x58] sm:$0xff]
        %v266 = vld [vmem:[%s188 + $0x60] sm:$0xff]
        %v267 = vld [vmem:[%s188 + $0x68] sm:$0xff]
        %v268 = vld [vmem:[%s188 + $0x70] sm:$0xff]
        %v269 = vld [vmem:[%s188 + $0x78] sm:$0xff]
        %v270 = vld [vmem:[%s188 + $0x80] sm:$0xff]
        %v271 = vld [vmem:[%s188 + $0x88] sm:$0xff]
        %v272 = vld [vmem:[%s188 + $0x90] sm:$0xff]
        %v273 = vld [vmem:[%s188 + $0x98] sm:$0xff]
        %v274 = vld [vmem:[%s188 + $0xa0] sm:$0xff]
        %v275 = vld [vmem:[%s188 + $0xa8] sm:$0xff]
        %v276 = vld [vmem:[%s188 + $0xb0] sm:$0xff]
        %v277 = vld [vmem:[%s188 + $0xb8] sm:$0xff]
        %v278 = vld [vmem:[%s188 + $0xc0] sm:$0xff]
        %v279 = vld [vmem:[%s188 + $0xc8] sm:$0xff]
        %v280 = vld [vmem:[%s188 + $0xd0] sm:$0xff]
        %v281 = vld [vmem:[%s188 + $0xd8] sm:$0xff]
        %v282 = vld [vmem:[%s188 + $0xe0] sm:$0xff]
        %v283 = vld [vmem:[%s188 + $0xe8] sm:$0xff]
        %v284 = vld [vmem:[%s188 + $0xf0] sm:$0xff]
        %v285 = vld [vmem:[%s188 + $0xf8] sm:$0xff]
        %287 = vset.pattern.permute.xlu0 0
        %288 = vperm.xlu0 %287, %v254
        %v289 = vpop.permute.xlu0 %288
        %292 = vset.pattern.permute.xlu0 0
        %293 = vperm.xlu0 %292, %v255
        %v294 = vpop.permute.xlu0 %293
        %297 = vset.pattern.permute.xlu0 0
        %298 = vperm.xlu0 %297, %v256
        %v299 = vpop.permute.xlu0 %298
        %302 = vset.pattern.permute.xlu0 0
        %303 = vperm.xlu0 %302, %v257
        %v304 = vpop.permute.xlu0 %303
        %307 = vset.pattern.permute.xlu0 0
        %308 = vperm.xlu0 %307, %v258
        %v309 = vpop.permute.xlu0 %308
        %312 = vset.pattern.permute.xlu0 0
        %313 = vperm.xlu0 %312, %v259
        %v314 = vpop.permute.xlu0 %313
        %317 = vset.pattern.permute.xlu0 0
        %318 = vperm.xlu0 %317, %v260
        %v319 = vpop.permute.xlu0 %318
        %322 = vset.pattern.permute.xlu0 0
        %323 = vperm.xlu0 %322, %v261
        %v324 = vpop.permute.xlu0 %323
        %327 = vset.pattern.permute.xlu0 0
        %328 = vperm.xlu0 %327, %v262
        %v329 = vpop.permute.xlu0 %328
        %332 = vset.pattern.permute.xlu0 0
        %333 = vperm.xlu0 %332, %v263
        %v334 = vpop.permute.xlu0 %333
        %337 = vset.pattern.permute.xlu0 0
        %338 = vperm.xlu0 %337, %v264
        %v339 = vpop.permute.xlu0 %338
        %342 = vset.pattern.permute.xlu0 0
        %343 = vperm.xlu0 %342, %v265
        %v344 = vpop.permute.xlu0 %343
        %347 = vset.pattern.permute.xlu0 0
        %348 = vperm.xlu0 %347, %v266
        %v349 = vpop.permute.xlu0 %348
        %352 = vset.pattern.permute.xlu0 0
        %353 = vperm.xlu0 %352, %v267
        %v354 = vpop.permute.xlu0 %353
        %357 = vset.pattern.permute.xlu0 0
        %358 = vperm.xlu0 %357, %v268
        %v359 = vpop.permute.xlu0 %358
        %362 = vset.pattern.permute.xlu0 0
        %363 = vperm.xlu0 %362, %v269
        %v364 = vpop.permute.xlu0 %363
        %367 = vset.pattern.permute.xlu0 0
        %368 = vperm.xlu0 %367, %v270
        %v369 = vpop.permute.xlu0 %368
        %372 = vset.pattern.permute.xlu0 0
        %373 = vperm.xlu0 %372, %v271
        %v374 = vpop.permute.xlu0 %373
        %377 = vset.pattern.permute.xlu0 0
        %378 = vperm.xlu0 %377, %v272
        %v379 = vpop.permute.xlu0 %378
        %382 = vset.pattern.permute.xlu0 0
        %383 = vperm.xlu0 %382, %v273
        %v384 = vpop.permute.xlu0 %383
        %387 = vset.pattern.permute.xlu0 0
        %388 = vperm.xlu0 %387, %v274
        %v389 = vpop.permute.xlu0 %388
        %392 = vset.pattern.permute.xlu0 0
        %393 = vperm.xlu0 %392, %v275
        %v394 = vpop.permute.xlu0 %393
        %397 = vset.pattern.permute.xlu0 0
        %398 = vperm.xlu0 %397, %v276
        %v399 = vpop.permute.xlu0 %398
        %402 = vset.pattern.permute.xlu0 0
        %403 = vperm.xlu0 %402, %v277
        %v404 = vpop.permute.xlu0 %403
        %407 = vset.pattern.permute.xlu0 0
        %408 = vperm.xlu0 %407, %v278
        %v409 = vpop.permute.xlu0 %408
        %412 = vset.pattern.permute.xlu0 0
        %413 = vperm.xlu0 %412, %v279
        %v414 = vpop.permute.xlu0 %413
        %417 = vset.pattern.permute.xlu0 0
        %418 = vperm.xlu0 %417, %v280
        %v419 = vpop.permute.xlu0 %418
        %422 = vset.pattern.permute.xlu0 0
        %423 = vperm.xlu0 %422, %v281
        %v424 = vpop.permute.xlu0 %423
        %427 = vset.pattern.permute.xlu0 0
        %428 = vperm.xlu0 %427, %v282
        %v429 = vpop.permute.xlu0 %428
        %432 = vset.pattern.permute.xlu0 0
        %433 = vperm.xlu0 %432, %v283
        %v434 = vpop.permute.xlu0 %433
        %437 = vset.pattern.permute.xlu0 0
        %438 = vperm.xlu0 %437, %v284
        %v439 = vpop.permute.xlu0 %438
        %442 = vset.pattern.permute.xlu0 0
        %443 = vperm.xlu0 %442, %v285
        %v444 = vpop.permute.xlu0 %443
        %v478 = vunpack.c.l.b16 %v190
        %v479 = vunpack.c.l.b16 %v191
        %v480 = vunpack.c.l.b16 %v192
        %v481 = vunpack.c.l.b16 %v193
        %v482 = vunpack.c.l.b16 %v194
        %v483 = vunpack.c.l.b16 %v195
        %v484 = vunpack.c.l.b16 %v196
        %v485 = vunpack.c.l.b16 %v197
        %v486 = vunpack.c.l.b16 %v198
        %v487 = vunpack.c.l.b16 %v199
        %v488 = vunpack.c.l.b16 %v200
        %v489 = vunpack.c.l.b16 %v201
        %v490 = vunpack.c.l.b16 %v202
        %v491 = vunpack.c.l.b16 %v203
        %v492 = vunpack.c.l.b16 %v204
        %v493 = vunpack.c.l.b16 %v205
        %v494 = vunpack.c.l.b16 %v206
        %v495 = vunpack.c.l.b16 %v207
        %v496 = vunpack.c.l.b16 %v208
        %v497 = vunpack.c.l.b16 %v209
        %v498 = vunpack.c.l.b16 %v210
        %v499 = vunpack.c.l.b16 %v211
        %v500 = vunpack.c.l.b16 %v212
        %v501 = vunpack.c.l.b16 %v213
        %v502 = vunpack.c.l.b16 %v214
        %v503 = vunpack.c.l.b16 %v215
        %v504 = vunpack.c.l.b16 %v216
        %v505 = vunpack.c.l.b16 %v217
        %v506 = vunpack.c.l.b16 %v218
        %v507 = vunpack.c.l.b16 %v219
        %v508 = vunpack.c.l.b16 %v220
        %v509 = vunpack.c.l.b16 %v221
        %v510 = vpack.c.b16 %v479, %v478
        %v511 = vpack.c.b16 %v481, %v480
        %v512 = vpack.c.b16 %v483, %v482
        %v513 = vpack.c.b16 %v485, %v484
        %v514 = vpack.c.b16 %v487, %v486
        %v515 = vpack.c.b16 %v489, %v488
        %v516 = vpack.c.b16 %v491, %v490
        %v517 = vpack.c.b16 %v493, %v492
        %v518 = vpack.c.b16 %v495, %v494
        %v519 = vpack.c.b16 %v497, %v496
        %v520 = vpack.c.b16 %v499, %v498
        %v521 = vpack.c.b16 %v501, %v500
        %v522 = vpack.c.b16 %v503, %v502
        %v523 = vpack.c.b16 %v505, %v504
        %v524 = vpack.c.b16 %v507, %v506
        %v525 = vpack.c.b16 %v509, %v508
        %v574 = vunpack.c.l.b16 %v222
        %v575 = vunpack.c.h.b16 %v222
        %v576 = vunpack.c.l.b16 %v223
        %v577 = vunpack.c.h.b16 %v223
        %v578 = vunpack.c.l.b16 %v224
        %v579 = vunpack.c.h.b16 %v224
        %v580 = vunpack.c.l.b16 %v225
        %v581 = vunpack.c.h.b16 %v225
        %v582 = vunpack.c.l.b16 %v226
        %v583 = vunpack.c.h.b16 %v226
        %v584 = vunpack.c.l.b16 %v227
        %v585 = vunpack.c.h.b16 %v227
        %v586 = vunpack.c.l.b16 %v228
        %v587 = vunpack.c.h.b16 %v228
        %v588 = vunpack.c.l.b16 %v229
        %v589 = vunpack.c.h.b16 %v229
        %v590 = vunpack.c.l.b16 %v230
        %v591 = vunpack.c.h.b16 %v230
        %v592 = vunpack.c.l.b16 %v231
        %v593 = vunpack.c.h.b16 %v231
        %v594 = vunpack.c.l.b16 %v232
        %v595 = vunpack.c.h.b16 %v232
        %v596 = vunpack.c.l.b16 %v233
        %v597 = vunpack.c.h.b16 %v233
        %v598 = vunpack.c.l.b16 %v234
        %v599 = vunpack.c.h.b16 %v234
        %v600 = vunpack.c.l.b16 %v235
        %v601 = vunpack.c.h.b16 %v235
        %v602 = vunpack.c.l.b16 %v236
        %v603 = vunpack.c.h.b16 %v236
        %v604 = vunpack.c.l.b16 %v237
        %v605 = vunpack.c.h.b16 %v237
        %v606 = vunpack.c.l.b16 %v238
        %v607 = vunpack.c.h.b16 %v238
        %v608 = vunpack.c.l.b16 %v239
        %v609 = vunpack.c.h.b16 %v239
        %v610 = vunpack.c.l.b16 %v240
        %v611 = vunpack.c.h.b16 %v240
        %v612 = vunpack.c.l.b16 %v241
        %v613 = vunpack.c.h.b16 %v241
        %v614 = vunpack.c.l.b16 %v242
        %v615 = vunpack.c.h.b16 %v242
        %v616 = vunpack.c.l.b16 %v243
        %v617 = vunpack.c.h.b16 %v243
        %v618 = vunpack.c.l.b16 %v244
        %v619 = vunpack.c.h.b16 %v244
        %v620 = vunpack.c.l.b16 %v245
        %v621 = vunpack.c.h.b16 %v245
        %v622 = vunpack.c.l.b16 %v246
        %v623 = vunpack.c.h.b16 %v246
        %v624 = vunpack.c.l.b16 %v247
        %v625 = vunpack.c.h.b16 %v247
        %v626 = vunpack.c.l.b16 %v248
        %v627 = vunpack.c.h.b16 %v248
        %v628 = vunpack.c.l.b16 %v249
        %v629 = vunpack.c.h.b16 %v249
        %v630 = vunpack.c.l.b16 %v250
        %v631 = vunpack.c.h.b16 %v250
        %v632 = vunpack.c.l.b16 %v251
        %v633 = vunpack.c.h.b16 %v251
        %v634 = vunpack.c.l.b16 %v252
        %v635 = vunpack.c.h.b16 %v252
        %v636 = vunpack.c.l.b16 %v253
        %v637 = vunpack.c.h.b16 %v253
        %v638 = vpack.c.b16 %v578, %v574
        %v639 = vpack.c.b16 %v579, %v575
        %v640 = vpack.c.b16 %v580, %v576
        %v641 = vpack.c.b16 %v581, %v577
        %v642 = vpack.c.b16 %v586, %v582
        %v643 = vpack.c.b16 %v587, %v583
        %v644 = vpack.c.b16 %v588, %v584
        %v645 = vpack.c.b16 %v589, %v585
        %v646 = vpack.c.b16 %v594, %v590
        %v647 = vpack.c.b16 %v595, %v591
        %v648 = vpack.c.b16 %v596, %v592
        %v649 = vpack.c.b16 %v597, %v593
        %v650 = vpack.c.b16 %v602, %v598
        %v651 = vpack.c.b16 %v603, %v599
        %v652 = vpack.c.b16 %v604, %v600
        %v653 = vpack.c.b16 %v605, %v601
        %v654 = vpack.c.b16 %v610, %v606
        %v655 = vpack.c.b16 %v611, %v607
        %v656 = vpack.c.b16 %v612, %v608
        %v657 = vpack.c.b16 %v613, %v609
        %v658 = vpack.c.b16 %v618, %v614
        %v659 = vpack.c.b16 %v619, %v615
        %v660 = vpack.c.b16 %v620, %v616
        %v661 = vpack.c.b16 %v621, %v617
        %v662 = vpack.c.b16 %v626, %v622
        %v663 = vpack.c.b16 %v627, %v623
        %v664 = vpack.c.b16 %v628, %v624
        %v665 = vpack.c.b16 %v629, %v625
        %v666 = vpack.c.b16 %v634, %v630
        %v667 = vpack.c.b16 %v635, %v631
        %v668 = vpack.c.b16 %v636, %v632
        %v669 = vpack.c.b16 %v637, %v633
        %702 = vmatprep.subr.bf16.mxu0 %v639
        %703 = vmatpush1.bf16.msra.mxu0 %v638
        %704 = vmatprep.subr.bf16.mxu0 %v643
        %705 = vmatpush1.bf16.msra.mxu0 %v642
        %706 = vmatprep.subr.bf16.mxu0 %v647
        %707 = vmatpush1.bf16.msra.mxu0 %v646
        %708 = vmatprep.subr.bf16.mxu0 %v651
        %709 = vmatpush1.bf16.msra.mxu0 %v650
        %710 = vmatprep.subr.bf16.mxu0 %v655
        %711 = vmatpush1.bf16.msra.mxu0 %v654
        %712 = vmatprep.subr.bf16.mxu0 %v659
        %713 = vmatpush1.bf16.msra.mxu0 %v658
        %714 = vmatprep.subr.bf16.mxu0 %v663
        %715 = vmatpush1.bf16.msra.mxu0 %v662
        %716 = vmatprep.subr.bf16.mxu0 %v667
        %717 = vmatpush1.bf16.msra.mxu0 %v666
        %718 = vmatprep.subr.bf16.mxu0 0
        %719 = vmatpush1.bf16.msra.mxu0 0
        %720 = vmatprep.subr.bf16.mxu0 0
        %721 = vmatpush1.bf16.msra.mxu0 0
        %722 = vmatprep.subr.bf16.mxu0 0
        %723 = vmatpush1.bf16.msra.mxu0 0
        %724 = vmatprep.subr.bf16.mxu0 0
        %725 = vmatpush1.bf16.msra.mxu0 0
        %726 = vmatprep.subr.bf16.mxu0 0
        %727 = vmatpush1.bf16.msra.mxu0 0
        %728 = vmatprep.subr.bf16.mxu0 0
        %729 = vmatpush1.bf16.msra.mxu0 0
        %730 = vmatprep.subr.bf16.mxu0 0
        %731 = vmatpush1.bf16.msra.mxu0 0
        %732 = vmatprep.subr.bf16.mxu0 0
        %733 = vmatpush1.bf16.msra.mxu0 0
        %734 = vmatprep.mubr.bf16.mxu0 0
        %735 = vmatmul.mubr.bf16.gmra.mrb[0].mxu0 %v510
        %v736 = vpop.f32.mrb[0].mxu0
        %v737 = vadd.f32 %v289, %v736
        %v738 = vpop.f32.mrb[0].mxu0
        %v739 = vadd.f32 %v289, %v738
        %v740 = vpop.f32.mrb[0].mxu0
        %v741 = vadd.f32 %v294, %v740
        %v742 = vpop.f32.mrb[0].mxu0
        %v743 = vadd.f32 %v294, %v742
        %744 = vmatprep.mubr.bf16.mxu0 0
        %745 = vmatmul.mubr.bf16.gmra.mrb[0].mxu0 %v511
        %v746 = vpop.f32.mrb[0].mxu0
        %v747 = vadd.f32 %v299, %v746
        %v748 = vpop.f32.mrb[0].mxu0
        %v749 = vadd.f32 %v299, %v748
        %v750 = vpop.f32.mrb[0].mxu0
        %v751 = vadd.f32 %v304, %v750
        %v752 = vpop.f32.mrb[0].mxu0
        %v753 = vadd.f32 %v304, %v752
        %754 = vmatprep.mubr.bf16.mxu0 0
        %755 = vmatmul.mubr.bf16.gmra.mrb[0].mxu0 %v512
        %v756 = vpop.f32.mrb[0].mxu0
        %v757 = vadd.f32 %v309, %v756
        %v758 = vpop.f32.mrb[0].mxu0
        %v759 = vadd.f32 %v309, %v758
        %v760 = vpop.f32.mrb[0].mxu0
        %v761 = vadd.f32 %v314, %v760
        %v762 = vpop.f32.mrb[0].mxu0
        %v763 = vadd.f32 %v314, %v762
        %764 = vmatprep.mubr.bf16.mxu0 0
        %765 = vmatmul.mubr.bf16.gmra.mrb[0].mxu0 %v513
        %v766 = vpop.f32.mrb[0].mxu0
        %v767 = vadd.f32 %v319, %v766
        %v768 = vpop.f32.mrb[0].mxu0
        %v769 = vadd.f32 %v319, %v768
        %v770 = vpop.f32.mrb[0].mxu0
        %v771 = vadd.f32 %v324, %v770
        %v772 = vpop.f32.mrb[0].mxu0
        %v773 = vadd.f32 %v324, %v772
        %774 = vmatprep.mubr.bf16.mxu0 0
        %775 = vmatmul.mubr.bf16.gmra.mrb[0].mxu0 %v514
        %v776 = vpop.f32.mrb[0].mxu0
        %v777 = vadd.f32 %v329, %v776
        %v778 = vpop.f32.mrb[0].mxu0
        %v779 = vadd.f32 %v329, %v778
        %v780 = vpop.f32.mrb[0].mxu0
        %v781 = vadd.f32 %v334, %v780
        %v782 = vpop.f32.mrb[0].mxu0
        %v783 = vadd.f32 %v334, %v782
        %784 = vmatprep.mubr.bf16.mxu0 0
        %785 = vmatmul.mubr.bf16.gmra.mrb[0].mxu0 %v515
        %v786 = vpop.f32.mrb[0].mxu0
        %v787 = vadd.f32 %v339, %v786
        %v788 = vpop.f32.mrb[0].mxu0
        %v789 = vadd.f32 %v339, %v788
        %v790 = vpop.f32.mrb[0].mxu0
        %v791 = vadd.f32 %v344, %v790
        %v792 = vpop.f32.mrb[0].mxu0
        %v793 = vadd.f32 %v344, %v792
        %794 = vmatprep.mubr.bf16.mxu0 0
        %795 = vmatmul.mubr.bf16.gmra.mrb[0].mxu0 %v516
        %v796 = vpop.f32.mrb[0].mxu0
        %v797 = vadd.f32 %v349, %v796
        %v798 = vpop.f32.mrb[0].mxu0
        %v799 = vadd.f32 %v349, %v798
        %v800 = vpop.f32.mrb[0].mxu0
        %v801 = vadd.f32 %v354, %v800
        %v802 = vpop.f32.mrb[0].mxu0
        %v803 = vadd.f32 %v354, %v802
        %804 = vmatprep.mubr.bf16.mxu0 0
        %805 = vmatmul.mubr.bf16.gmra.mrb[0].mxu0 %v517
        %v806 = vpop.f32.mrb[0].mxu0
        %v807 = vadd.f32 %v359, %v806
        %v808 = vpop.f32.mrb[0].mxu0
        %v809 = vadd.f32 %v359, %v808
        %v810 = vpop.f32.mrb[0].mxu0
        %v811 = vadd.f32 %v364, %v810
        %v812 = vpop.f32.mrb[0].mxu0
        %v813 = vadd.f32 %v364, %v812
        %814 = vmatprep.mubr.bf16.mxu0 0
        %815 = vmatmul.mubr.bf16.gmra.mrb[0].mxu0 %v518
        %v816 = vpop.f32.mrb[0].mxu0
        %v817 = vadd.f32 %v369, %v816
        %v818 = vpop.f32.mrb[0].mxu0
        %v819 = vadd.f32 %v369, %v818
        %v820 = vpop.f32.mrb[0].mxu0
        %v821 = vadd.f32 %v374, %v820
        %v822 = vpop.f32.mrb[0].mxu0
        %v823 = vadd.f32 %v374, %v822
        %824 = vmatprep.mubr.bf16.mxu0 0
        %825 = vmatmul.mubr.bf16.gmra.mrb[0].mxu0 %v519
        %v826 = vpop.f32.mrb[0].mxu0
        %v827 = vadd.f32 %v379, %v826
        %v828 = vpop.f32.mrb[0].mxu0
        %v829 = vadd.f32 %v379, %v828
        %v830 = vpop.f32.mrb[0].mxu0
        %v831 = vadd.f32 %v384, %v830
        %v832 = vpop.f32.mrb[0].mxu0
        %v833 = vadd.f32 %v384, %v832
        %834 = vmatprep.mubr.bf16.mxu0 0
        %835 = vmatmul.mubr.bf16.gmra.mrb[0].mxu0 %v520
        %v836 = vpop.f32.mrb[0].mxu0
        %v837 = vadd.f32 %v389, %v836
        %v838 = vpop.f32.mrb[0].mxu0
        %v839 = vadd.f32 %v389, %v838
        %v840 = vpop.f32.mrb[0].mxu0
        %v841 = vadd.f32 %v394, %v840
        %v842 = vpop.f32.mrb[0].mxu0
        %v843 = vadd.f32 %v394, %v842
        %844 = vmatprep.mubr.bf16.mxu0 0
        %845 = vmatmul.mubr.bf16.gmra.mrb[0].mxu0 %v521
        %v846 = vpop.f32.mrb[0].mxu0
        %v847 = vadd.f32 %v399, %v846
        %v848 = vpop.f32.mrb[0].mxu0
        %v849 = vadd.f32 %v399, %v848
        %v850 = vpop.f32.mrb[0].mxu0
        %v851 = vadd.f32 %v404, %v850
        %v852 = vpop.f32.mrb[0].mxu0
        %v853 = vadd.f32 %v404, %v852
        %854 = vmatprep.mubr.bf16.mxu0 0
        %855 = vmatmul.mubr.bf16.gmra.mrb[0].mxu0 %v522
        %v856 = vpop.f32.mrb[0].mxu0
        %v857 = vadd.f32 %v409, %v856
        %v858 = vpop.f32.mrb[0].mxu0
        %v859 = vadd.f32 %v409, %v858
        %v860 = vpop.f32.mrb[0].mxu0
        %v861 = vadd.f32 %v414, %v860
        %v862 = vpop.f32.mrb[0].mxu0
        %v863 = vadd.f32 %v414, %v862
        %864 = vmatprep.mubr.bf16.mxu0 0
        %865 = vmatmul.mubr.bf16.gmra.mrb[0].mxu0 %v523
        %v866 = vpop.f32.mrb[0].mxu0
        %v867 = vadd.f32 %v419, %v866
        %v868 = vpop.f32.mrb[0].mxu0
        %v869 = vadd.f32 %v419, %v868
        %v870 = vpop.f32.mrb[0].mxu0
        %v871 = vadd.f32 %v424, %v870
        %v872 = vpop.f32.mrb[0].mxu0
        %v873 = vadd.f32 %v424, %v872
        %874 = vmatprep.mubr.bf16.mxu0 0
        %875 = vmatmul.mubr.bf16.gmra.mrb[0].mxu0 %v524
        %v876 = vpop.f32.mrb[0].mxu0
        %v877 = vadd.f32 %v429, %v876
        %v878 = vpop.f32.mrb[0].mxu0
        %v879 = vadd.f32 %v429, %v878
        %v880 = vpop.f32.mrb[0].mxu0
        %v881 = vadd.f32 %v434, %v880
        %v882 = vpop.f32.mrb[0].mxu0
        %v883 = vadd.f32 %v434, %v882
        %884 = vmatprep.mubr.bf16.mxu0 0
        %885 = vmatmul.mubr.bf16.gmra.mrb[0].mxu0 %v525
        %v886 = vpop.f32.mrb[0].mxu0
        %v887 = vadd.f32 %v439, %v886
        %v888 = vpop.f32.mrb[0].mxu0
        %v889 = vadd.f32 %v439, %v888
        %v890 = vpop.f32.mrb[0].mxu0
        %v891 = vadd.f32 %v444, %v890
        %v892 = vpop.f32.mrb[0].mxu0
        %v893 = vadd.f32 %v444, %v892
        %894 = vdwg.mxu0
        %895 = vmatprep.subr.bf16.mxu0 %v641
        %896 = vmatpush1.bf16.msra.mxu0 %v640
        %897 = vmatprep.subr.bf16.mxu0 %v645
        %898 = vmatpush1.bf16.msra.mxu0 %v644
        %899 = vmatprep.subr.bf16.mxu0 %v649
        %900 = vmatpush1.bf16.msra.mxu0 %v648
        %901 = vmatprep.subr.bf16.mxu0 %v653
        %902 = vmatpush1.bf16.msra.mxu0 %v652
        %903 = vmatprep.subr.bf16.mxu0 %v657
        %904 = vmatpush1.bf16.msra.mxu0 %v656
        %905 = vmatprep.subr.bf16.mxu0 %v661
        %906 = vmatpush1.bf16.msra.mxu0 %v660
        %907 = vmatprep.subr.bf16.mxu0 %v665
        %908 = vmatpush1.bf16.msra.mxu0 %v664
        %909 = vmatprep.subr.bf16.mxu0 %v669
        %910 = vmatpush1.bf16.msra.mxu0 %v668
        %911 = vmatprep.subr.bf16.mxu0 0
        %912 = vmatpush1.bf16.msra.mxu0 0
        %913 = vmatprep.subr.bf16.mxu0 0
        %914 = vmatpush1.bf16.msra.mxu0 0
        %915 = vmatprep.subr.bf16.mxu0 0
        %916 = vmatpush1.bf16.msra.mxu0 0
        %917 = vmatprep.subr.bf16.mxu0 0
        %918 = vmatpush1.bf16.msra.mxu0 0
        %919 = vmatprep.subr.bf16.mxu0 0
        %920 = vmatpush1.bf16.msra.mxu0 0
        %921 = vmatprep.subr.bf16.mxu0 0
        %922 = vmatpush1.bf16.msra.mxu0 0
        %923 = vmatprep.subr.bf16.mxu0 0
        %924 = vmatpush1.bf16.msra.mxu0 0
        %925 = vmatprep.subr.bf16.mxu0 0
        %926 = vmatpush1.bf16.msra.mxu0 0
        %927 = vmatprep.mubr.bf16.mxu0 0
        %928 = vmatmul.mubr.bf16.gmra.mrb[0].mxu0 %v510
        %v929 = vpop.f32.mrb[0].mxu0
        %v930 = vadd.f32 %v289, %v929
        %v931 = vpop.f32.mrb[0].mxu0
        %v932 = vadd.f32 %v289, %v931
        %v933 = vpop.f32.mrb[0].mxu0
        %v934 = vadd.f32 %v294, %v933
        %v935 = vpop.f32.mrb[0].mxu0
        %v936 = vadd.f32 %v294, %v935
        %937 = vmatprep.mubr.bf16.mxu0 0
        %938 = vmatmul.mubr.bf16.gmra.mrb[0].mxu0 %v511
        %v939 = vpop.f32.mrb[0].mxu0
        %v940 = vadd.f32 %v299, %v939
        %v941 = vpop.f32.mrb[0].mxu0
        %v942 = vadd.f32 %v299, %v941
        %v943 = vpop.f32.mrb[0].mxu0
        %v944 = vadd.f32 %v304, %v943
        %v945 = vpop.f32.mrb[0].mxu0
        %v946 = vadd.f32 %v304, %v945
        %947 = vmatprep.mubr.bf16.mxu0 0
        %948 = vmatmul.mubr.bf16.gmra.mrb[0].mxu0 %v512
        %v949 = vpop.f32.mrb[0].mxu0
        %v950 = vadd.f32 %v309, %v949
        %v951 = vpop.f32.mrb[0].mxu0
        %v952 = vadd.f32 %v309, %v951
        %v953 = vpop.f32.mrb[0].mxu0
        %v954 = vadd.f32 %v314, %v953
        %v955 = vpop.f32.mrb[0].mxu0
        %v956 = vadd.f32 %v314, %v955
        %957 = vmatprep.mubr.bf16.mxu0 0
        %958 = vmatmul.mubr.bf16.gmra.mrb[0].mxu0 %v513
        %v959 = vpop.f32.mrb[0].mxu0
        %v960 = vadd.f32 %v319, %v959
        %v961 = vpop.f32.mrb[0].mxu0
        %v962 = vadd.f32 %v319, %v961
        %v963 = vpop.f32.mrb[0].mxu0
        %v964 = vadd.f32 %v324, %v963
        %v965 = vpop.f32.mrb[0].mxu0
        %v966 = vadd.f32 %v324, %v965
        %967 = vmatprep.mubr.bf16.mxu0 0
        %968 = vmatmul.mubr.bf16.gmra.mrb[0].mxu0 %v514
        %v969 = vpop.f32.mrb[0].mxu0
        %v970 = vadd.f32 %v329, %v969
        %v971 = vpop.f32.mrb[0].mxu0
        %v972 = vadd.f32 %v329, %v971
        %v973 = vpop.f32.mrb[0].mxu0
        %v974 = vadd.f32 %v334, %v973
        %v975 = vpop.f32.mrb[0].mxu0
        %v976 = vadd.f32 %v334, %v975
        %977 = vmatprep.mubr.bf16.mxu0 0
        %978 = vmatmul.mubr.bf16.gmra.mrb[0].mxu0 %v515
        %v979 = vpop.f32.mrb[0].mxu0
        %v980 = vadd.f32 %v339, %v979
        %v981 = vpop.f32.mrb[0].mxu0
        %v982 = vadd.f32 %v339, %v981
        %v983 = vpop.f32.mrb[0].mxu0
        %v984 = vadd.f32 %v344, %v983
        %v985 = vpop.f32.mrb[0].mxu0
        %v986 = vadd.f32 %v344, %v985
        %987 = vmatprep.mubr.bf16.mxu0 0
        %988 = vmatmul.mubr.bf16.gmra.mrb[0].mxu0 %v516
        %v989 = vpop.f32.mrb[0].mxu0
        %v990 = vadd.f32 %v349, %v989
        %v991 = vpop.f32.mrb[0].mxu0
        %v992 = vadd.f32 %v349, %v991
        %v993 = vpop.f32.mrb[0].mxu0
        %v994 = vadd.f32 %v354, %v993
        %v995 = vpop.f32.mrb[0].mxu0
        %v996 = vadd.f32 %v354, %v995
        %997 = vmatprep.mubr.bf16.mxu0 0
        %998 = vmatmul.mubr.bf16.gmra.mrb[0].mxu0 %v517
        %v999 = vpop.f32.mrb[0].mxu0
        %v1000 = vadd.f32 %v359, %v999
        %v1001 = vpop.f32.mrb[0].mxu0
        %v1002 = vadd.f32 %v359, %v1001
        %v1003 = vpop.f32.mrb[0].mxu0
        %v1004 = vadd.f32 %v364, %v1003
        %v1005 = vpop.f32.mrb[0].mxu0
        %v1006 = vadd.f32 %v364, %v1005
        %1007 = vmatprep.mubr.bf16.mxu0 0
        %1008 = vmatmul.mubr.bf16.gmra.mrb[0].mxu0 %v518
        %v1009 = vpop.f32.mrb[0].mxu0
        %v1010 = vadd.f32 %v369, %v1009
        %v1011 = vpop.f32.mrb[0].mxu0
        %v1012 = vadd.f32 %v369, %v1011
        %v1013 = vpop.f32.mrb[0].mxu0
        %v1014 = vadd.f32 %v374, %v1013
        %v1015 = vpop.f32.mrb[0].mxu0
        %v1016 = vadd.f32 %v374, %v1015
        %1017 = vmatprep.mubr.bf16.mxu0 0
        %1018 = vmatmul.mubr.bf16.gmra.mrb[0].mxu0 %v519
        %v1019 = vpop.f32.mrb[0].mxu0
        %v1020 = vadd.f32 %v379, %v1019
        %v1021 = vpop.f32.mrb[0].mxu0
        %v1022 = vadd.f32 %v379, %v1021
        %v1023 = vpop.f32.mrb[0].mxu0
        %v1024 = vadd.f32 %v384, %v1023
        %v1025 = vpop.f32.mrb[0].mxu0
        %v1026 = vadd.f32 %v384, %v1025
        %1027 = vmatprep.mubr.bf16.mxu0 0
        %1028 = vmatmul.mubr.bf16.gmra.mrb[0].mxu0 %v520
        %v1029 = vpop.f32.mrb[0].mxu0
        %v1030 = vadd.f32 %v389, %v1029
        %v1031 = vpop.f32.mrb[0].mxu0
        %v1032 = vadd.f32 %v389, %v1031
        %v1033 = vpop.f32.mrb[0].mxu0
        %v1034 = vadd.f32 %v394, %v1033
        %v1035 = vpop.f32.mrb[0].mxu0
        %v1036 = vadd.f32 %v394, %v1035
        %1037 = vmatprep.mubr.bf16.mxu0 0
        %1038 = vmatmul.mubr.bf16.gmra.mrb[0].mxu0 %v521
        %v1039 = vpop.f32.mrb[0].mxu0
        %v1040 = vadd.f32 %v399, %v1039
        %v1041 = vpop.f32.mrb[0].mxu0
        %v1042 = vadd.f32 %v399, %v1041
        %v1043 = vpop.f32.mrb[0].mxu0
        %v1044 = vadd.f32 %v404, %v1043
        %v1045 = vpop.f32.mrb[0].mxu0
        %v1046 = vadd.f32 %v404, %v1045
        %1047 = vmatprep.mubr.bf16.mxu0 0
        %1048 = vmatmul.mubr.bf16.gmra.mrb[0].mxu0 %v522
        %v1049 = vpop.f32.mrb[0].mxu0
        %v1050 = vadd.f32 %v409, %v1049
        %v1051 = vpop.f32.mrb[0].mxu0
        %v1052 = vadd.f32 %v409, %v1051
        %v1053 = vpop.f32.mrb[0].mxu0
        %v1054 = vadd.f32 %v414, %v1053
        %v1055 = vpop.f32.mrb[0].mxu0
        %v1056 = vadd.f32 %v414, %v1055
        %1057 = vmatprep.mubr.bf16.mxu0 0
        %1058 = vmatmul.mubr.bf16.gmra.mrb[0].mxu0 %v523
        %v1059 = vpop.f32.mrb[0].mxu0
        %v1060 = vadd.f32 %v419, %v1059
        %v1061 = vpop.f32.mrb[0].mxu0
        %v1062 = vadd.f32 %v419, %v1061
        %v1063 = vpop.f32.mrb[0].mxu0
        %v1064 = vadd.f32 %v424, %v1063
        %v1065 = vpop.f32.mrb[0].mxu0
        %v1066 = vadd.f32 %v424, %v1065
        %1067 = vmatprep.mubr.bf16.mxu0 0
        %1068 = vmatmul.mubr.bf16.gmra.mrb[0].mxu0 %v524
        %v1069 = vpop.f32.mrb[0].mxu0
        %v1070 = vadd.f32 %v429, %v1069
        %v1071 = vpop.f32.mrb[0].mxu0
        %v1072 = vadd.f32 %v429, %v1071
        %v1073 = vpop.f32.mrb[0].mxu0
        %v1074 = vadd.f32 %v434, %v1073
        %v1075 = vpop.f32.mrb[0].mxu0
        %v1076 = vadd.f32 %v434, %v1075
        %1077 = vmatprep.mubr.bf16.mxu0 0
        %1078 = vmatmul.mubr.bf16.gmra.mrb[0].mxu0 %v525
        %v1079 = vpop.f32.mrb[0].mxu0
        %v1080 = vadd.f32 %v439, %v1079
        %v1081 = vpop.f32.mrb[0].mxu0
        %v1082 = vadd.f32 %v439, %v1081
        %v1083 = vpop.f32.mrb[0].mxu0
        %v1084 = vadd.f32 %v444, %v1083
        %v1085 = vpop.f32.mrb[0].mxu0
        %v1086 = vadd.f32 %v444, %v1085
        %1087 = vdwg.mxu0
        %v1088 = vpack.c.bf16 %v741, %v737
        %v1089 = vpack.c.bf16 %v743, %v739
        %v1090 = vpack.c.bf16 %v934, %v930
        %v1091 = vpack.c.bf16 %v936, %v932
        %v1092 = vpack.c.bf16 %v751, %v747
        %v1093 = vpack.c.bf16 %v753, %v749
        %v1094 = vpack.c.bf16 %v944, %v940
        %v1095 = vpack.c.bf16 %v946, %v942
        %v1096 = vpack.c.bf16 %v761, %v757
        %v1097 = vpack.c.bf16 %v763, %v759
        %v1098 = vpack.c.bf16 %v954, %v950
        %v1099 = vpack.c.bf16 %v956, %v952
        %v1100 = vpack.c.bf16 %v771, %v767
        %v1101 = vpack.c.bf16 %v773, %v769
        %v1102 = vpack.c.bf16 %v964, %v960
        %v1103 = vpack.c.bf16 %v966, %v962
        %v1104 = vpack.c.bf16 %v781, %v777
        %v1105 = vpack.c.bf16 %v783, %v779
        %v1106 = vpack.c.bf16 %v974, %v970
        %v1107 = vpack.c.bf16 %v976, %v972
        %v1108 = vpack.c.bf16 %v791, %v787
        %v1109 = vpack.c.bf16 %v793, %v789
        %v1110 = vpack.c.bf16 %v984, %v980
        %v1111 = vpack.c.bf16 %v986, %v982
        %v1112 = vpack.c.bf16 %v801, %v797
        %v1113 = vpack.c.bf16 %v803, %v799
        %v1114 = vpack.c.bf16 %v994, %v990
        %v1115 = vpack.c.bf16 %v996, %v992
        %v1116 = vpack.c.bf16 %v811, %v807
        %v1117 = vpack.c.bf16 %v813, %v809
        %v1118 = vpack.c.bf16 %v1004, %v1000
        %v1119 = vpack.c.bf16 %v1006, %v1002
        %v1120 = vpack.c.bf16 %v821, %v817
        %v1121 = vpack.c.bf16 %v823, %v819
        %v1122 = vpack.c.bf16 %v1014, %v1010
        %v1123 = vpack.c.bf16 %v1016, %v1012
        %v1124 = vpack.c.bf16 %v831, %v827
        %v1125 = vpack.c.bf16 %v833, %v829
        %v1126 = vpack.c.bf16 %v1024, %v1020
        %v1127 = vpack.c.bf16 %v1026, %v1022
        %v1128 = vpack.c.bf16 %v841, %v837
        %v1129 = vpack.c.bf16 %v843, %v839
        %v1130 = vpack.c.bf16 %v1034, %v1030
        %v1131 = vpack.c.bf16 %v1036, %v1032
        %v1132 = vpack.c.bf16 %v851, %v847
        %v1133 = vpack.c.bf16 %v853, %v849
        %v1134 = vpack.c.bf16 %v1044, %v1040
        %v1135 = vpack.c.bf16 %v1046, %v1042
        %v1136 = vpack.c.bf16 %v861, %v857
        %v1137 = vpack.c.bf16 %v863, %v859
        %v1138 = vpack.c.bf16 %v1054, %v1050
        %v1139 = vpack.c.bf16 %v1056, %v1052
        %v1140 = vpack.c.bf16 %v871, %v867
        %v1141 = vpack.c.bf16 %v873, %v869
        %v1142 = vpack.c.bf16 %v1064, %v1060
        %v1143 = vpack.c.bf16 %v1066, %v1062
        %v1144 = vpack.c.bf16 %v881, %v877
        %v1145 = vpack.c.bf16 %v883, %v879
        %v1146 = vpack.c.bf16 %v1074, %v1070
        %v1147 = vpack.c.bf16 %v1076, %v1072
        %v1148 = vpack.c.bf16 %v891, %v887
        %v1149 = vpack.c.bf16 %v893, %v889
        %v1150 = vpack.c.bf16 %v1084, %v1080
        %v1151 = vpack.c.bf16 %v1086, %v1082
        %v1216 = vunpack.c.l.b16 %v1088
        %v1217 = vunpack.c.l.b16 %v1089
        %v1218 = vunpack.c.l.b16 %v1090
        %v1219 = vunpack.c.l.b16 %v1091
        %v1220 = vunpack.c.h.b16 %v1088
        %v1221 = vunpack.c.h.b16 %v1089
        %v1222 = vunpack.c.h.b16 %v1090
        %v1223 = vunpack.c.h.b16 %v1091
        %v1224 = vunpack.c.l.b16 %v1092
        %v1225 = vunpack.c.l.b16 %v1093
        %v1226 = vunpack.c.l.b16 %v1094
        %v1227 = vunpack.c.l.b16 %v1095
        %v1228 = vunpack.c.h.b16 %v1092
        %v1229 = vunpack.c.h.b16 %v1093
        %v1230 = vunpack.c.h.b16 %v1094
        %v1231 = vunpack.c.h.b16 %v1095
        %v1232 = vunpack.c.l.b16 %v1096
        %v1233 = vunpack.c.l.b16 %v1097
        %v1234 = vunpack.c.l.b16 %v1098
        %v1235 = vunpack.c.l.b16 %v1099
        %v1236 = vunpack.c.h.b16 %v1096
        %v1237 = vunpack.c.h.b16 %v1097
        %v1238 = vunpack.c.h.b16 %v1098
        %v1239 = vunpack.c.h.b16 %v1099
        %v1240 = vunpack.c.l.b16 %v1100
        %v1241 = vunpack.c.l.b16 %v1101
        %v1242 = vunpack.c.l.b16 %v1102
        %v1243 = vunpack.c.l.b16 %v1103
        %v1244 = vunpack.c.h.b16 %v1100
        %v1245 = vunpack.c.h.b16 %v1101
        %v1246 = vunpack.c.h.b16 %v1102
        %v1247 = vunpack.c.h.b16 %v1103
        %v1248 = vunpack.c.l.b16 %v1104
        %v1249 = vunpack.c.l.b16 %v1105
        %v1250 = vunpack.c.l.b16 %v1106
        %v1251 = vunpack.c.l.b16 %v1107
        %v1252 = vunpack.c.h.b16 %v1104
        %v1253 = vunpack.c.h.b16 %v1105
        %v1254 = vunpack.c.h.b16 %v1106
        %v1255 = vunpack.c.h.b16 %v1107
        %v1256 = vunpack.c.l.b16 %v1108
        %v1257 = vunpack.c.l.b16 %v1109
        %v1258 = vunpack.c.l.b16 %v1110
        %v1259 = vunpack.c.l.b16 %v1111
        %v1260 = vunpack.c.h.b16 %v1108
        %v1261 = vunpack.c.h.b16 %v1109
        %v1262 = vunpack.c.h.b16 %v1110
        %v1263 = vunpack.c.h.b16 %v1111
        %v1264 = vunpack.c.l.b16 %v1112
        %v1265 = vunpack.c.l.b16 %v1113
        %v1266 = vunpack.c.l.b16 %v1114
        %v1267 = vunpack.c.l.b16 %v1115
        %v1268 = vunpack.c.h.b16 %v1112
        %v1269 = vunpack.c.h.b16 %v1113
        %v1270 = vunpack.c.h.b16 %v1114
        %v1271 = vunpack.c.h.b16 %v1115
        %v1272 = vunpack.c.l.b16 %v1116
        %v1273 = vunpack.c.l.b16 %v1117
        %v1274 = vunpack.c.l.b16 %v1118
        %v1275 = vunpack.c.l.b16 %v1119
        %v1276 = vunpack.c.h.b16 %v1116
        %v1277 = vunpack.c.h.b16 %v1117
        %v1278 = vunpack.c.h.b16 %v1118
        %v1279 = vunpack.c.h.b16 %v1119
        %v1280 = vunpack.c.l.b16 %v1120
        %v1281 = vunpack.c.l.b16 %v1121
        %v1282 = vunpack.c.l.b16 %v1122
        %v1283 = vunpack.c.l.b16 %v1123
        %v1284 = vunpack.c.h.b16 %v1120
        %v1285 = vunpack.c.h.b16 %v1121
        %v1286 = vunpack.c.h.b16 %v1122
        %v1287 = vunpack.c.h.b16 %v1123
        %v1288 = vunpack.c.l.b16 %v1124
        %v1289 = vunpack.c.l.b16 %v1125
        %v1290 = vunpack.c.l.b16 %v1126
        %v1291 = vunpack.c.l.b16 %v1127
        %v1292 = vunpack.c.h.b16 %v1124
        %v1293 = vunpack.c.h.b16 %v1125
        %v1294 = vunpack.c.h.b16 %v1126
        %v1295 = vunpack.c.h.b16 %v1127
        %v1296 = vunpack.c.l.b16 %v1128
        %v1297 = vunpack.c.l.b16 %v1129
        %v1298 = vunpack.c.l.b16 %v1130
        %v1299 = vunpack.c.l.b16 %v1131
        %v1300 = vunpack.c.h.b16 %v1128
        %v1301 = vunpack.c.h.b16 %v1129
        %v1302 = vunpack.c.h.b16 %v1130
        %v1303 = vunpack.c.h.b16 %v1131
        %v1304 = vunpack.c.l.b16 %v1132
        %v1305 = vunpack.c.l.b16 %v1133
        %v1306 = vunpack.c.l.b16 %v1134
        %v1307 = vunpack.c.l.b16 %v1135
        %v1308 = vunpack.c.h.b16 %v1132
        %v1309 = vunpack.c.h.b16 %v1133
        %v1310 = vunpack.c.h.b16 %v1134
        %v1311 = vunpack.c.h.b16 %v1135
        %v1312 = vunpack.c.l.b16 %v1136
        %v1313 = vunpack.c.l.b16 %v1137
        %v1314 = vunpack.c.l.b16 %v1138
        %v1315 = vunpack.c.l.b16 %v1139
        %v1316 = vunpack.c.h.b16 %v1136
        %v1317 = vunpack.c.h.b16 %v1137
        %v1318 = vunpack.c.h.b16 %v1138
        %v1319 = vunpack.c.h.b16 %v1139
        %v1320 = vunpack.c.l.b16 %v1140
        %v1321 = vunpack.c.l.b16 %v1141
        %v1322 = vunpack.c.l.b16 %v1142
        %v1323 = vunpack.c.l.b16 %v1143
        %v1324 = vunpack.c.h.b16 %v1140
        %v1325 = vunpack.c.h.b16 %v1141
        %v1326 = vunpack.c.h.b16 %v1142
        %v1327 = vunpack.c.h.b16 %v1143
        %v1328 = vunpack.c.l.b16 %v1144
        %v1329 = vunpack.c.l.b16 %v1145
        %v1330 = vunpack.c.l.b16 %v1146
        %v1331 = vunpack.c.l.b16 %v1147
        %v1332 = vunpack.c.h.b16 %v1144
        %v1333 = vunpack.c.h.b16 %v1145
        %v1334 = vunpack.c.h.b16 %v1146
        %v1335 = vunpack.c.h.b16 %v1147
        %v1336 = vunpack.c.l.b16 %v1148
        %v1337 = vunpack.c.l.b16 %v1149
        %v1338 = vunpack.c.l.b16 %v1150
        %v1339 = vunpack.c.l.b16 %v1151
        %v1340 = vunpack.c.h.b16 %v1148
        %v1341 = vunpack.c.h.b16 %v1149
        %v1342 = vunpack.c.h.b16 %v1150
        %v1343 = vunpack.c.h.b16 %v1151
        %v1344 = vpack.c.b16 %v1217, %v1216
        %v1345 = vpack.c.b16 %v1219, %v1218
        %v1346 = vpack.c.b16 %v1221, %v1220
        %v1347 = vpack.c.b16 %v1223, %v1222
        %v1348 = vpack.c.b16 %v1225, %v1224
        %v1349 = vpack.c.b16 %v1227, %v1226
        %v1350 = vpack.c.b16 %v1229, %v1228
        %v1351 = vpack.c.b16 %v1231, %v1230
        %v1352 = vpack.c.b16 %v1233, %v1232
        %v1353 = vpack.c.b16 %v1235, %v1234
        %v1354 = vpack.c.b16 %v1237, %v1236
        %v1355 = vpack.c.b16 %v1239, %v1238
        %v1356 = vpack.c.b16 %v1241, %v1240
        %v1357 = vpack.c.b16 %v1243, %v1242
        %v1358 = vpack.c.b16 %v1245, %v1244
        %v1359 = vpack.c.b16 %v1247, %v1246
        %v1360 = vpack.c.b16 %v1249, %v1248
        %v1361 = vpack.c.b16 %v1251, %v1250
        %v1362 = vpack.c.b16 %v1253, %v1252
        %v1363 = vpack.c.b16 %v1255, %v1254
        %v1364 = vpack.c.b16 %v1257, %v1256
        %v1365 = vpack.c.b16 %v1259, %v1258
        %v1366 = vpack.c.b16 %v1261, %v1260
        %v1367 = vpack.c.b16 %v1263, %v1262
        %v1368 = vpack.c.b16 %v1265, %v1264
        %v1369 = vpack.c.b16 %v1267, %v1266
        %v1370 = vpack.c.b16 %v1269, %v1268
        %v1371 = vpack.c.b16 %v1271, %v1270
        %v1372 = vpack.c.b16 %v1273, %v1272
        %v1373 = vpack.c.b16 %v1275, %v1274
        %v1374 = vpack.c.b16 %v1277, %v1276
        %v1375 = vpack.c.b16 %v1279, %v1278
        %v1376 = vpack.c.b16 %v1281, %v1280
        %v1377 = vpack.c.b16 %v1283, %v1282
        %v1378 = vpack.c.b16 %v1285, %v1284
        %v1379 = vpack.c.b16 %v1287, %v1286
        %v1380 = vpack.c.b16 %v1289, %v1288
        %v1381 = vpack.c.b16 %v1291, %v1290
        %v1382 = vpack.c.b16 %v1293, %v1292
        %v1383 = vpack.c.b16 %v1295, %v1294
        %v1384 = vpack.c.b16 %v1297, %v1296
        %v1385 = vpack.c.b16 %v1299, %v1298
        %v1386 = vpack.c.b16 %v1301, %v1300
        %v1387 = vpack.c.b16 %v1303, %v1302
        %v1388 = vpack.c.b16 %v1305, %v1304
        %v1389 = vpack.c.b16 %v1307, %v1306
        %v1390 = vpack.c.b16 %v1309, %v1308
        %v1391 = vpack.c.b16 %v1311, %v1310
        %v1392 = vpack.c.b16 %v1313, %v1312
        %v1393 = vpack.c.b16 %v1315, %v1314
        %v1394 = vpack.c.b16 %v1317, %v1316
        %v1395 = vpack.c.b16 %v1319, %v1318
        %v1396 = vpack.c.b16 %v1321, %v1320
        %v1397 = vpack.c.b16 %v1323, %v1322
        %v1398 = vpack.c.b16 %v1325, %v1324
        %v1399 = vpack.c.b16 %v1327, %v1326
        %v1400 = vpack.c.b16 %v1329, %v1328
        %v1401 = vpack.c.b16 %v1331, %v1330
        %v1402 = vpack.c.b16 %v1333, %v1332
        %v1403 = vpack.c.b16 %v1335, %v1334
        %v1404 = vpack.c.b16 %v1337, %v1336
        %v1405 = vpack.c.b16 %v1339, %v1338
        %v1406 = vpack.c.b16 %v1341, %v1340
        %v1407 = vpack.c.b16 %v1343, %v1342
        %1472 = vst [vmem:[%s178] sm:$0xff] %v1344
        %1473 = vst [vmem:[%s178 + $0x8] sm:$0xff] %v1345
        %1474 = vst [vmem:[%s178 + $0x10] sm:$0xff] %v1346
        %1475 = vst [vmem:[%s178 + $0x18] sm:$0xff] %v1347
        %1476 = vst [vmem:[%s178 + $0x20] sm:$0xff] %v1348
        %1477 = vst [vmem:[%s178 + $0x28] sm:$0xff] %v1349
        %1478 = vst [vmem:[%s178 + $0x30] sm:$0xff] %v1350
        %1479 = vst [vmem:[%s178 + $0x38] sm:$0xff] %v1351
        %1480 = vst [vmem:[%s178 + $0x40] sm:$0xff] %v1352
        %1481 = vst [vmem:[%s178 + $0x48] sm:$0xff] %v1353
        %1482 = vst [vmem:[%s178 + $0x50] sm:$0xff] %v1354
        %1483 = vst [vmem:[%s178 + $0x58] sm:$0xff] %v1355
        %1484 = vst [vmem:[%s178 + $0x60] sm:$0xff] %v1356
        %1485 = vst [vmem:[%s178 + $0x68] sm:$0xff] %v1357
        %1486 = vst [vmem:[%s178 + $0x70] sm:$0xff] %v1358
        %1487 = vst [vmem:[%s178 + $0x78] sm:$0xff] %v1359
        %1488 = vst [vmem:[%s178 + $0x80] sm:$0xff] %v1360
        %1489 = vst [vmem:[%s178 + $0x88] sm:$0xff] %v1361
        %1490 = vst [vmem:[%s178 + $0x90] sm:$0xff] %v1362
        %1491 = vst [vmem:[%s178 + $0x98] sm:$0xff] %v1363
        %1492 = vst [vmem:[%s178 + $0xa0] sm:$0xff] %v1364
        %1493 = vst [vmem:[%s178 + $0xa8] sm:$0xff] %v1365
        %1494 = vst [vmem:[%s178 + $0xb0] sm:$0xff] %v1366
        %1495 = vst [vmem:[%s178 + $0xb8] sm:$0xff] %v1367
        %1496 = vst [vmem:[%s178 + $0xc0] sm:$0xff] %v1368
        %1497 = vst [vmem:[%s178 + $0xc8] sm:$0xff] %v1369
        %1498 = vst [vmem:[%s178 + $0xd0] sm:$0xff] %v1370
        %1499 = vst [vmem:[%s178 + $0xd8] sm:$0xff] %v1371
        %1500 = vst [vmem:[%s178 + $0xe0] sm:$0xff] %v1372
        %1501 = vst [vmem:[%s178 + $0xe8] sm:$0xff] %v1373
        %1502 = vst [vmem:[%s178 + $0xf0] sm:$0xff] %v1374
        %1503 = vst [vmem:[%s178 + $0xf8] sm:$0xff] %v1375
        %1504 = vst [vmem:[%s178 + $0x100] sm:$0xff] %v1376
        %1505 = vst [vmem:[%s178 + $0x108] sm:$0xff] %v1377
        %1506 = vst [vmem:[%s178 + $0x110] sm:$0xff] %v1378
        %1507 = vst [vmem:[%s178 + $0x118] sm:$0xff] %v1379
        %1508 = vst [vmem:[%s178 + $0x120] sm:$0xff] %v1380
        %1509 = vst [vmem:[%s178 + $0x128] sm:$0xff] %v1381
        %1510 = vst [vmem:[%s178 + $0x130] sm:$0xff] %v1382
        %1511 = vst [vmem:[%s178 + $0x138] sm:$0xff] %v1383
        %1512 = vst [vmem:[%s178 + $0x140] sm:$0xff] %v1384
        %1513 = vst [vmem:[%s178 + $0x148] sm:$0xff] %v1385
        %1514 = vst [vmem:[%s178 + $0x150] sm:$0xff] %v1386
        %1515 = vst [vmem:[%s178 + $0x158] sm:$0xff] %v1387
        %1516 = vst [vmem:[%s178 + $0x160] sm:$0xff] %v1388
        %1517 = vst [vmem:[%s178 + $0x168] sm:$0xff] %v1389
        %1518 = vst [vmem:[%s178 + $0x170] sm:$0xff] %v1390
        %1519 = vst [vmem:[%s178 + $0x178] sm:$0xff] %v1391
        %1520 = vst [vmem:[%s178 + $0x180] sm:$0xff] %v1392
        %1521 = vst [vmem:[%s178 + $0x188] sm:$0xff] %v1393
        %1522 = vst [vmem:[%s178 + $0x190] sm:$0xff] %v1394
        %1523 = vst [vmem:[%s178 + $0x198] sm:$0xff] %v1395
        %1524 = vst [vmem:[%s178 + $0x1a0] sm:$0xff] %v1396
        %1525 = vst [vmem:[%s178 + $0x1a8] sm:$0xff] %v1397
        %1526 = vst [vmem:[%s178 + $0x1b0] sm:$0xff] %v1398
        %1527 = vst [vmem:[%s178 + $0x1b8] sm:$0xff] %v1399
        %1528 = vst [vmem:[%s178 + $0x1c0] sm:$0xff] %v1400
        %1529 = vst [vmem:[%s178 + $0x1c8] sm:$0xff] %v1401
        %1530 = vst [vmem:[%s178 + $0x1d0] sm:$0xff] %v1402
        %1531 = vst [vmem:[%s178 + $0x1d8] sm:$0xff] %v1403
        %1532 = vst [vmem:[%s178 + $0x1e0] sm:$0xff] %v1404
        %1533 = vst [vmem:[%s178 + $0x1e8] sm:$0xff] %v1405
        %1534 = vst [vmem:[%s178 + $0x1f0] sm:$0xff] %v1406
        %1535 = vst [vmem:[%s178 + $0x1f8] sm:$0xff] %v1407
        %s1536 = sand.u32 %s98, 1
        %s1537 = scalar_lea.sflag [#allocation3], %s1536
        %s1538 = sand.u32 %s98, 1
        %s1539 = smul.addr %s1538, 512
        %s1540 = scalar_lea.vmem [#allocation2], %s1539
        // Predicated region
        $region33: #{tpu_custom_call.1} parent=31 // pred_check
          %p1541 = pneg %p108
        $region34: #{tpu_custom_call.1} parent=31 // pred_check_branch
          %1543 = sbr.rel (%p1541) target = $region36
        $region35: #{tpu_custom_call.1} parent=31 // pred_region
          %s1545 = ssub.s32 8192, 8192
          %1546 = vsyncadd %s1537, %s1545
          %s1547 = smul.addr %s17, 128
          %s1548 = smul.addr %s1547, 64
          %s1549 = scalar_lea.hbm %s3, %s1548
          %s1550 = sshll.u32 %s1540, 4
          %s1551 = int_to_ptr.vmem [resolvable:$true] %s1550
          %1556 = dma.vmem_to_hbm [thread:$0]  %s1551, 8192, %s1549, %s1537, 256, 256, 16
        $region36: #{tpu_custom_call.1} parent=31 // pred_fallthru
          _
      $region32: #{tpu_custom_call.1} parent=5 // pred_fallthru
        _
      %p1557 = scmp.le.s32.totalorder 2, %s12
      // Predicated region
      $region37: #{tpu_custom_call.1} parent=5 // pred_check
        %p1558 = pneg %p1557
      $region38: #{tpu_custom_call.1} parent=5 // pred_check_branch
        %1560 = sbr.rel (%p1558) target = $region40
      $region39: #{tpu_custom_call.1} parent=5 // pred_region
        %s1561 = ssub.s32 %s12, 2
        // Predicated region
        $region41: #{tpu_custom_call.1} parent=39 // pred_check
          %p1562 = pneg %p114
        $region42: #{tpu_custom_call.1} parent=39 // pred_check_branch
          %1564 = sbr.rel (%p1562) target = $region44
        $region43: #{tpu_custom_call.1} parent=39 // pred_region
          %s1565 = sand.u32 %s99, 1
          %s1566 = scalar_lea.sflag [#allocation3], %s1565
          %s1567 = sand.u32 %s99, 1
          %s1568 = smul.addr %s1567, 512
          %s1569 = scalar_lea.vmem [#allocation2], %s1568
          %1570 = dma.done %s1566, 8192
        $region44: #{tpu_custom_call.1} parent=39 // pred_fallthru
          _
      $region40: #{tpu_custom_call.1} parent=5 // pred_fallthru
        _
    $region6: #{tpu_custom_call.1} parent=1 // loop_footer
      %s16 = sadd.s32 1, %s12
    $region7: #{tpu_custom_call.1} parent=1 // loop_footer_branch
      %11 = sbr.rel target = $region3
    $region8: #{tpu_custom_call.1} parent=1 // loop_exit
      _
    %1571 = vsyncpa [#allocation3], 1
    %s1572 = scalar_lea.sflag [#allocation3], 1
    %1573 = vsyncpa %s1572, 1

</llo_original>
